<compile_context>
chip_gen: v6e
topology: v6e:2x2x1
jax: 0.10.0
libtpu: 0.0.40
codegen_flags: <defaults>
</compile_context>

<pallas_src>
import functools

import jax
import jax.numpy as jnp
import numpy as np
from jax.experimental import pallas as pl
from jax.experimental.pallas import tpu as pltpu

LN_EPS = 1e-5
_RANK1_PROJ_MAX_C = 32   # above this, (C, C) projections go to the MXU


def _encoder_sa_kernel(xT_ref, kT_ref, vT_ref, w_ref, lnp_ref, out_ref, *, C: int):
    """One query tile, channel-major layout.

    xT_ref : (C, TQ)   query tile of x^T                      (f32)
    kT_ref : (C, Nk)   K^T  = Wk @ LN(y)^T                    (bf16, precomputed, single-buffered)
    vT_ref : (C, Nk)   V'^T = Wo @ Wv @ LN(y)^T               (bf16, precomputed, single-buffered)
    w_ref  : (3C, C)   [Wq / sqrt(C); W_ff1; W_ff2]           (f32)
    lnp_ref: (C, 6)    columns = ln_w, ln_b, ff1_w, ff1_b, ff2_w, ff2_b
    out_ref: (C, TQ)
    """
    xT = xT_ref[...]
    w = w_ref[...]
    lnp = lnp_ref[...]

    # Hoist LayerNorm parameter columns once (JAX does not CSE the slice +
    # implicit lane-broadcast if re-emitted inside each ln() call).
    g0, b0 = lnp[:, 0:1], lnp[:, 1:2]     # pre-attention LN
    g1, b1 = lnp[:, 2:3], lnp[:, 3:4]     # ff_self LN #1
    g2, b2 = lnp[:, 4:5], lnp[:, 5:6]     # ff_self LN #2

    def ln(v, gamma, beta):
        # LayerNorm over the channel axis (axis 0).  jnp reductions lower to a
        # VALU combine + one XLU sublane reduce (scales to realistic C).
        # Biased variance, eps=1e-5 (matches torch).
        mu = jnp.mean(v, axis=0, keepdims=True)
        d = v - mu
        var = jnp.mean(d * d, axis=0, keepdims=True)
        return d * jax.lax.rsqrt(var + LN_EPS) * gamma + beta

    def proj(wmat, v):
        # (C, C) @ (C, N).  For tiny C the MXU pass is degenerate, so use C
        # rank-1 broadcast-FMA updates on the VPU; for realistic C hand it to
        # the MXU (bf16 operands, f32 accumulation).
        if C <= _RANK1_PROJ_MAX_C:
            acc = wmat[:, 0:1] * v[0:1, :]
            for j in range(1, C):
                acc = acc + wmat[:, j:j + 1] * v[j:j + 1, :]
            return acc
        return jnp.dot(wmat.astype(jnp.bfloat16), v.astype(jnp.bfloat16),
                       preferred_element_type=jnp.float32)

    # --- attention (single head, head_dim = C) ------------------------------
    x_ln = ln(xT, g0, b0)
    qT = proj(w[0:C, :], x_ln)                                   # (C, TQ), 1/sqrt(C) folded in

    # scores^T: contract the channel dim of K^T and q^T -> (Nk, TQ).  Keeping
    # queries on lanes makes max/sum over keys sublane reductions whose (1,TQ)
    # statistics broadcast directly onto attn^T.
    sT = jax.lax.dot_general(
        kT_ref[...], qT.astype(jnp.bfloat16),
        (((0,), (0,)), ((), ())),
        preferred_element_type=jnp.float32)                      # (Nk, TQ)

    # Unnormalized softmax in f32 (v5e has no bf16 VPU/EUP).
    sT = sT - jnp.max(sT, axis=0, keepdims=True)
    pT = jnp.exp(sT)                                             # (Nk, TQ), values <= 1
    denom = jnp.sum(pT, axis=0, keepdims=True)                   # (1, TQ)
    # TODO(synk): on v6e/v7x compute exp / keep pT in bf16 (f32 row-sum) to
    # halve EUP pushes; kept f32 here so the same kernel is safe on v5e.

    # attn'^T = V'^T @ P^T : contract the key dim.                (C, TQ)
    attnT = jax.lax.dot_general(
        vT_ref[...], pT.astype(jnp.bfloat16),
        (((1,), (0,)), ((), ())),
        preferred_element_type=jnp.float32)

    # Deferred softmax normalization: approx reciprocal (EUP slot), broadcast
    # (1, TQ) across the C sublanes -> ~2 vreg multiplies instead of a full
    # pass over the (Nk, TQ) probability tile.
    attnT = attnT * pl.reciprocal(denom, approx=True)
    # TODO(synk): for large Nk (esp. v7x, 64 MiB VMEM) add a key-axis grid dim
    # ("arbitrary") with m/l/acc scratch (online softmax) instead of
    # materializing the full (Nk, TQ) score/prob tiles.

    avT = attnT + xT                                             # residual 1 (on raw x)

    # --- ff_self: LN -> Linear -> LN -> Linear (no biases) ------------------
    h = proj(w[C:2 * C, :], ln(avT, g1, b1))
    h = proj(w[2 * C:3 * C, :], ln(h, g2, b2))

    out_ref[...] = (h + avT).astype(out_ref.dtype)               # residual 2


def _pick_tq(n_rows: int, requested):
    """Per-generation query-tile size: 128 on v7x (2 TCs), 256 on v5e/v6e."""
    tq = requested
    if tq is None:
        kind = ""
        try:
            kind = jax.devices()[0].device_kind.lower()
        except Exception:
            pass
        tq = 128 if "v7" in kind else 256
    tq = min(tq, n_rows)
    if n_rows % tq:
        tq = n_rows            # TODO(synk): ragged-tail masking path
    assert tq % 128 == 0 or tq == n_rows, "query tile must be lane-dense"
    return tq


def transformer_encoder_sa(x, y, params, *, num_channels: int, tq=None):
    """Pallas implementation of TransformerEncoderSA.forward.

    Returns a flat vector of shape (B*C*H*W,), matching attention_value.view(-1).
    """
    C = num_channels
    x2 = jnp.reshape(x, (-1, C)).astype(jnp.float32)   # == torch .view(-1, C)
    y2 = jnp.reshape(y, (-1, C)).astype(jnp.float32)
    N, Nk = x2.shape[0], y2.shape[0]
    tq = _pick_tq(N, tq)
    assert N % tq == 0, "query rows must tile evenly"

    ln_w, ln_b = params["ln_w"], params["ln_b"]

    # --- one-time precompute (plain XLA, hoisted out of the kernel grid) ----
    mu = jnp.mean(y2, axis=-1, keepdims=True)
    var = jnp.mean((y2 - mu) ** 2, axis=-1, keepdims=True)
    y_ln = (y2 - mu) * jax.lax.rsqrt(var + LN_EPS) * ln_w + ln_b            # (Nk, C)
    kT = (params["wk"] @ y_ln.T).astype(jnp.bfloat16)                       # (C, Nk)
    vT = (params["wo"] @ params["wv"] @ y_ln.T).astype(jnp.bfloat16)        # (C, Nk) = V'^T

    wq_scaled = params["wq"] * (1.0 / float(np.sqrt(C)))
    wpack = jnp.concatenate([wq_scaled, params["w1"], params["w2"]], axis=0)  # (3C, C)
    lnp = jnp.stack(
        [ln_w, ln_b,
         params["ff_ln1_w"], params["ff_ln1_b"],
         params["ff_ln2_w"], params["ff_ln2_b"]], axis=1)                     # (C, 6)

    xT = x2.T                                                                 # (C, N) lane-dense

    # Grid-invariant inputs: single-buffer (index_map is constant, so the copy
    # happens once; double-buffering would only waste VMEM).
    def const_spec(shape):
        return pl.BlockSpec(shape, lambda i: (0, 0), pipeline_mode=pl.Buffered(1))

    # Raise the scoped-VMEM limit only when the materialized (Nk, TQ)
    # score/prob tiles actually need it (scoped defaults ~16/32/32 MiB).
    est_bytes = (
        Nk * tq * 4 * 2            # sT + pT (f32)
        + 2 * C * Nk * 2           # K^T, V'^T (bf16, single-buffered)
        + 2 * 2 * C * tq * 4       # double-buffered x^T / out tiles
        + 6 * C * tq * 4           # ln / proj temporaries (rough)
    )
    compiler_kwargs = dict(dimension_semantics=("parallel",))
    if est_bytes > 12 * 1024 * 1024:
        compiler_kwargs["vmem_limit_bytes"] = int(min(2 * est_bytes, 60 * 1024 * 1024))

    kernel = functools.partial(_encoder_sa_kernel, C=C)
    outT = pl.pallas_call(
        kernel,
        out_shape=jax.ShapeDtypeStruct((C, N), jnp.float32),
        grid=(N // tq,),
        in_specs=[
            pl.BlockSpec((C, tq), lambda i: (0, i)),        # x^T tile (query rows)
            const_spec((C, Nk)),                            # K^T  (constant block)
            const_spec((C, Nk)),                            # V'^T (constant block)
            const_spec((3 * C, C)),                         # packed projection weights
            const_spec((C, 6)),                             # packed LayerNorm params
        ],
        out_specs=pl.BlockSpec((C, tq), lambda i: (0, i)),  # lane-dense output slab
        compiler_params=pltpu.CompilerParams(**compiler_kwargs),
    )(xT, kT, vT, wpack, lnp)

    # TODO(synk): for large N keep the consumer channel-major (or emit bf16)
    # instead of this full HBM transpose; kept here so the result matches
    # torch's attention_value.view(-1) row-major layout exactly.
    return outT.T.reshape(-1)


def init_params(key, num_channels: int):
    """Deterministic parameter init; shapes mirror the nn.Module __init__ (torch layout)."""
    C = num_channels
    ks = jax.random.split(key, 4)
    scale = 0.2
    # nn.MultiheadAttention: in_proj_weight (3C, C), out_proj.weight (C, C), bias=False.
    in_proj = scale * jax.random.normal(ks[0], (3 * C, C), jnp.float32)
    ones = jnp.ones((C,), jnp.float32)
    zeros = jnp.zeros((C,), jnp.float32)
    return {
        "wq": in_proj[:C], "wk": in_proj[C:2 * C], "wv": in_proj[2 * C:],
        "wo": scale * jax.random.normal(ks[1], (C, C), jnp.float32),
        # ff_self Linears (C, C), bias=False.
        "w1": scale * jax.random.normal(ks[2], (C, C), jnp.float32),
        "w2": scale * jax.random.normal(ks[3], (C, C), jnp.float32),
        # shared pre-attention LayerNorm + the two ff_self LayerNorms
        "ln_w": ones, "ln_b": zeros,
        "ff_ln1_w": ones, "ff_ln1_b": zeros,
        "ff_ln2_w": ones, "ff_ln2_b": zeros,
    }


def _reference(x, y, params, num_channels):
    """Pure-JAX reference of the exact torch forward, for a correctness check."""
    C = num_channels
    x2 = jnp.reshape(x, (-1, C)).astype(jnp.float32)
    y2 = jnp.reshape(y, (-1, C)).astype(jnp.float32)

    def ln(v, w, b):
        mu = jnp.mean(v, axis=-1, keepdims=True)
        var = jnp.mean((v - mu) ** 2, axis=-1, keepdims=True)
        return (v - mu) * jax.lax.rsqrt(var + LN_EPS) * w + b

    x_ln = ln(x2, params["ln_w"], params["ln_b"])
    y_ln = ln(y2, params["ln_w"], params["ln_b"])
    q = x_ln @ params["wq"].T
    k = y_ln @ params["wk"].T
    v = y_ln @ params["wv"].T
    s = (q @ k.T) / jnp.sqrt(jnp.float32(C))
    p = jax.nn.softmax(s, axis=-1)
    attn = (p @ v) @ params["wo"].T
    av = attn + x2
    h = ln(av, params["ff_ln1_w"], params["ff_ln1_b"]) @ params["w1"].T
    h = ln(h, params["ff_ln2_w"], params["ff_ln2_b"]) @ params["w2"].T
    return (h + av).reshape(-1)


if __name__ == "__main__":
    B, C, H, W = 2, 4, 16, 16          # num_channels = 4; N = B*C*H*W / C = 512 rows
    key = jax.random.PRNGKey(0)
    kx, ky, kp = jax.random.split(key, 3)
    x = jax.random.normal(kx, (B, C, H, W), jnp.float32)
    y = jax.random.normal(ky, (B, C, H, W), jnp.float32)
    params = init_params(kp, C)

    out = transformer_encoder_sa(x, y, params, num_channels=C)
    out = jax.block_until_ready(out)

    ref = _reference(x, y, params, C)
    np.testing.assert_allclose(np.asarray(out), np.asarray(ref), rtol=1e-2, atol=1e-2)
    assert out.shape == (B * C * H * W,)
    print("KERNEL_OK")
</pallas_src>

<mosaic_0001>
module attributes {stable_mosaic.version = 11 : i64} {
  func.func @_encoder_sa_kernel(%arg0: i32, %arg1: memref<4x256xf32, #tpu.memory_space<vmem>>, %arg2: memref<4x512xbf16, #tpu.memory_space<vmem>>, %arg3: memref<4x512xbf16, #tpu.memory_space<vmem>>, %arg4: memref<12x4xf32, #tpu.memory_space<vmem>>, %arg5: memref<4x6xf32, #tpu.memory_space<vmem>>, %arg6: memref<4x256xf32, #tpu.memory_space<vmem>>) attributes {dimension_semantics = [#tpu.dimension_semantics<parallel>], iteration_bounds = array<i64: 2>, scalar_prefetch = 0 : i64, scratch_operands = 0 : i64, tpu.core_type = #tpu.core_type<tc>, window_params = [{transform_indices = @transform_0, window_bounds = array<i64: 4, 256>}, {pipeline_mode = #tpu.pipeline_mode<synchronous>, transform_indices = @transform_1, window_bounds = array<i64: 4, 512>}, {pipeline_mode = #tpu.pipeline_mode<synchronous>, transform_indices = @transform_2, window_bounds = array<i64: 4, 512>}, {pipeline_mode = #tpu.pipeline_mode<synchronous>, transform_indices = @transform_3, window_bounds = array<i64: 12, 4>}, {pipeline_mode = #tpu.pipeline_mode<synchronous>, transform_indices = @transform_4, window_bounds = array<i64: 4, 6>}, {transform_indices = @transform_5, window_bounds = array<i64: 4, 256>}]} {
    %c0 = arith.constant 0 : index
    %c0_0 = arith.constant 0 : index
    %0 = vector.load %arg1[%c0, %c0_0] : memref<4x256xf32, #tpu.memory_space<vmem>>, vector<4x256xf32>
    %c0_1 = arith.constant 0 : index
    %c0_2 = arith.constant 0 : index
    %1 = vector.load %arg4[%c0_1, %c0_2] : memref<12x4xf32, #tpu.memory_space<vmem>>, vector<12x4xf32>
    %c0_3 = arith.constant 0 : index
    %c0_4 = arith.constant 0 : index
    %2 = vector.load %arg5[%c0_3, %c0_4] : memref<4x6xf32, #tpu.memory_space<vmem>>, vector<4x6xf32>
    %3 = vector.extract_strided_slice %2 {offsets = [0, 0], sizes = [4, 1], strides = [1, 1]} : vector<4x6xf32> to vector<4x1xf32>
    %4 = vector.extract_strided_slice %2 {offsets = [0, 1], sizes = [4, 1], strides = [1, 1]} : vector<4x6xf32> to vector<4x1xf32>
    %5 = vector.extract_strided_slice %2 {offsets = [0, 2], sizes = [4, 1], strides = [1, 1]} : vector<4x6xf32> to vector<4x1xf32>
    %6 = vector.extract_strided_slice %2 {offsets = [0, 3], sizes = [4, 1], strides = [1, 1]} : vector<4x6xf32> to vector<4x1xf32>
    %7 = vector.extract_strided_slice %2 {offsets = [0, 4], sizes = [4, 1], strides = [1, 1]} : vector<4x6xf32> to vector<4x1xf32>
    %8 = vector.extract_strided_slice %2 {offsets = [0, 5], sizes = [4, 1], strides = [1, 1]} : vector<4x6xf32> to vector<4x1xf32>
    %cst = arith.constant dense<0.000000e+00> : vector<256xf32>
    %9 = vector.multi_reduction <add>, %0, %cst [0] : vector<4x256xf32> to vector<256xf32>
    %10 = vector.shape_cast %9 : vector<256xf32> to vector<1x256xf32>
    %cst_5 = arith.constant 4.000000e+00 : f32
    %11 = vector.broadcast %cst_5 : f32 to vector<1x256xf32>
    %12 = arith.divf %10, %11 : vector<1x256xf32>
    %13 = vector.broadcast %12 : vector<1x256xf32> to vector<4x256xf32>
    %14 = arith.subf %0, %13 : vector<4x256xf32>
    %15 = arith.mulf %14, %14 : vector<4x256xf32>
    %cst_6 = arith.constant dense<0.000000e+00> : vector<256xf32>
    %16 = vector.multi_reduction <add>, %15, %cst_6 [0] : vector<4x256xf32> to vector<256xf32>
    %17 = vector.shape_cast %16 : vector<256xf32> to vector<1x256xf32>
    %cst_7 = arith.constant 4.000000e+00 : f32
    %18 = vector.broadcast %cst_7 : f32 to vector<1x256xf32>
    %19 = arith.divf %17, %18 : vector<1x256xf32>
    %cst_8 = arith.constant 9.99999974E-6 : f32
    %20 = vector.broadcast %cst_8 : f32 to vector<1x256xf32>
    %21 = arith.addf %19, %20 : vector<1x256xf32>
    %22 = math.rsqrt %21 : vector<1x256xf32>
    %23 = vector.broadcast %22 : vector<1x256xf32> to vector<4x256xf32>
    %24 = arith.mulf %14, %23 : vector<4x256xf32>
    %25 = vector.broadcast %3 : vector<4x1xf32> to vector<4x256xf32>
    %26 = arith.mulf %24, %25 : vector<4x256xf32>
    %27 = vector.broadcast %4 : vector<4x1xf32> to vector<4x256xf32>
    %28 = arith.addf %26, %27 : vector<4x256xf32>
    %29 = vector.extract_strided_slice %1 {offsets = [0, 0], sizes = [4, 4], strides = [1, 1]} : vector<12x4xf32> to vector<4x4xf32>
    %30 = vector.extract_strided_slice %29 {offsets = [0, 0], sizes = [4, 1], strides = [1, 1]} : vector<4x4xf32> to vector<4x1xf32>
    %31 = vector.extract_strided_slice %28 {offsets = [0, 0], sizes = [1, 256], strides = [1, 1]} : vector<4x256xf32> to vector<1x256xf32>
    %32 = vector.broadcast %30 : vector<4x1xf32> to vector<4x256xf32>
    %33 = vector.broadcast %31 : vector<1x256xf32> to vector<4x256xf32>
    %34 = arith.mulf %32, %33 : vector<4x256xf32>
    %35 = vector.extract_strided_slice %29 {offsets = [0, 1], sizes = [4, 1], strides = [1, 1]} : vector<4x4xf32> to vector<4x1xf32>
    %36 = vector.extract_strided_slice %28 {offsets = [1, 0], sizes = [1, 256], strides = [1, 1]} : vector<4x256xf32> to vector<1x256xf32>
    %37 = vector.broadcast %35 : vector<4x1xf32> to vector<4x256xf32>
    %38 = vector.broadcast %36 : vector<1x256xf32> to vector<4x256xf32>
    %39 = arith.mulf %37, %38 : vector<4x256xf32>
    %40 = arith.addf %34, %39 : vector<4x256xf32>
    %41 = vector.extract_strided_slice %29 {offsets = [0, 2], sizes = [4, 1], strides = [1, 1]} : vector<4x4xf32> to vector<4x1xf32>
    %42 = vector.extract_strided_slice %28 {offsets = [2, 0], sizes = [1, 256], strides = [1, 1]} : vector<4x256xf32> to vector<1x256xf32>
    %43 = vector.broadcast %41 : vector<4x1xf32> to vector<4x256xf32>
    %44 = vector.broadcast %42 : vector<1x256xf32> to vector<4x256xf32>
    %45 = arith.mulf %43, %44 : vector<4x256xf32>
    %46 = arith.addf %40, %45 : vector<4x256xf32>
    %47 = vector.extract_strided_slice %29 {offsets = [0, 3], sizes = [4, 1], strides = [1, 1]} : vector<4x4xf32> to vector<4x1xf32>
    %48 = vector.extract_strided_slice %28 {offsets = [3, 0], sizes = [1, 256], strides = [1, 1]} : vector<4x256xf32> to vector<1x256xf32>
    %49 = vector.broadcast %47 : vector<4x1xf32> to vector<4x256xf32>
    %50 = vector.broadcast %48 : vector<1x256xf32> to vector<4x256xf32>
    %51 = arith.mulf %49, %50 : vector<4x256xf32>
    %52 = arith.addf %46, %51 : vector<4x256xf32>
    %c0_9 = arith.constant 0 : index
    %c0_10 = arith.constant 0 : index
    %53 = vector.load %arg2[%c0_9, %c0_10] : memref<4x512xbf16, #tpu.memory_space<vmem>>, vector<4x512xbf16>
    %54 = arith.truncf %52 : vector<4x256xf32> to vector<4x256xbf16>
    %cst_11 = arith.constant dense<0.000000e+00> : vector<512x256xf32>
    %55 = tpu.matmul %53, %54, %cst_11 {dimension_numbers = #tpu.dot_dimension_numbers<[0], [0], [1], [1], [0, 1, 1, 1], [], []>} : vector<4x512xbf16>, vector<4x256xbf16>, vector<512x256xf32> -> vector<512x256xf32>
    %cst_12 = arith.constant dense<0xFF800000> : vector<256xf32>
    %56 = vector.multi_reduction <maximumf>, %55, %cst_12 [0] : vector<512x256xf32> to vector<256xf32>
    %57 = vector.shape_cast %56 : vector<256xf32> to vector<1x256xf32>
    %58 = vector.broadcast %57 : vector<1x256xf32> to vector<512x256xf32>
    %59 = arith.subf %55, %58 : vector<512x256xf32>
    %60 = math.exp %59 : vector<512x256xf32>
    %cst_13 = arith.constant dense<0.000000e+00> : vector<256xf32>
    %61 = vector.multi_reduction <add>, %60, %cst_13 [0] : vector<512x256xf32> to vector<256xf32>
    %62 = vector.shape_cast %61 : vector<256xf32> to vector<1x256xf32>
    %c0_14 = arith.constant 0 : index
    %c0_15 = arith.constant 0 : index
    %63 = vector.load %arg3[%c0_14, %c0_15] : memref<4x512xbf16, #tpu.memory_space<vmem>>, vector<4x512xbf16>
    %64 = arith.truncf %60 : vector<512x256xf32> to vector<512x256xbf16>
    %cst_16 = arith.constant dense<0.000000e+00> : vector<4x256xf32>
    %65 = tpu.matmul %63, %64, %cst_16 {dimension_numbers = #tpu.dot_dimension_numbers<[1], [0], [0], [1], [0, 0, 1, 1], [], []>} : vector<4x512xbf16>, vector<512x256xbf16>, vector<4x256xf32> -> vector<4x256xf32>
    %66 = tpu.reciprocal %62 {approx = true} : vector<1x256xf32> -> vector<1x256xf32>
    %67 = vector.broadcast %66 : vector<1x256xf32> to vector<4x256xf32>
    %68 = arith.mulf %65, %67 : vector<4x256xf32>
    %69 = arith.addf %68, %0 : vector<4x256xf32>
    %70 = vector.extract_strided_slice %1 {offsets = [4, 0], sizes = [4, 4], strides = [1, 1]} : vector<12x4xf32> to vector<4x4xf32>
    %cst_17 = arith.constant dense<0.000000e+00> : vector<256xf32>
    %71 = vector.multi_reduction <add>, %69, %cst_17 [0] : vector<4x256xf32> to vector<256xf32>
    %72 = vector.shape_cast %71 : vector<256xf32> to vector<1x256xf32>
    %cst_18 = arith.constant 4.000000e+00 : f32
    %73 = vector.broadcast %cst_18 : f32 to vector<1x256xf32>
    %74 = arith.divf %72, %73 : vector<1x256xf32>
    %75 = vector.broadcast %74 : vector<1x256xf32> to vector<4x256xf32>
    %76 = arith.subf %69, %75 : vector<4x256xf32>
    %77 = arith.mulf %76, %76 : vector<4x256xf32>
    %cst_19 = arith.constant dense<0.000000e+00> : vector<256xf32>
    %78 = vector.multi_reduction <add>, %77, %cst_19 [0] : vector<4x256xf32> to vector<256xf32>
    %79 = vector.shape_cast %78 : vector<256xf32> to vector<1x256xf32>
    %cst_20 = arith.constant 4.000000e+00 : f32
    %80 = vector.broadcast %cst_20 : f32 to vector<1x256xf32>
    %81 = arith.divf %79, %80 : vector<1x256xf32>
    %cst_21 = arith.constant 9.99999974E-6 : f32
    %82 = vector.broadcast %cst_21 : f32 to vector<1x256xf32>
    %83 = arith.addf %81, %82 : vector<1x256xf32>
    %84 = math.rsqrt %83 : vector<1x256xf32>
    %85 = vector.broadcast %84 : vector<1x256xf32> to vector<4x256xf32>
    %86 = arith.mulf %76, %85 : vector<4x256xf32>
    %87 = vector.broadcast %5 : vector<4x1xf32> to vector<4x256xf32>
    %88 = arith.mulf %86, %87 : vector<4x256xf32>
    %89 = vector.broadcast %6 : vector<4x1xf32> to vector<4x256xf32>
    %90 = arith.addf %88, %89 : vector<4x256xf32>
    %91 = vector.extract_strided_slice %70 {offsets = [0, 0], sizes = [4, 1], strides = [1, 1]} : vector<4x4xf32> to vector<4x1xf32>
    %92 = vector.extract_strided_slice %90 {offsets = [0, 0], sizes = [1, 256], strides = [1, 1]} : vector<4x256xf32> to vector<1x256xf32>
    %93 = vector.broadcast %91 : vector<4x1xf32> to vector<4x256xf32>
    %94 = vector.broadcast %92 : vector<1x256xf32> to vector<4x256xf32>
    %95 = arith.mulf %93, %94 : vector<4x256xf32>
    %96 = vector.extract_strided_slice %70 {offsets = [0, 1], sizes = [4, 1], strides = [1, 1]} : vector<4x4xf32> to vector<4x1xf32>
    %97 = vector.extract_strided_slice %90 {offsets = [1, 0], sizes = [1, 256], strides = [1, 1]} : vector<4x256xf32> to vector<1x256xf32>
    %98 = vector.broadcast %96 : vector<4x1xf32> to vector<4x256xf32>
    %99 = vector.broadcast %97 : vector<1x256xf32> to vector<4x256xf32>
    %100 = arith.mulf %98, %99 : vector<4x256xf32>
    %101 = arith.addf %95, %100 : vector<4x256xf32>
    %102 = vector.extract_strided_slice %70 {offsets = [0, 2], sizes = [4, 1], strides = [1, 1]} : vector<4x4xf32> to vector<4x1xf32>
    %103 = vector.extract_strided_slice %90 {offsets = [2, 0], sizes = [1, 256], strides = [1, 1]} : vector<4x256xf32> to vector<1x256xf32>
    %104 = vector.broadcast %102 : vector<4x1xf32> to vector<4x256xf32>
    %105 = vector.broadcast %103 : vector<1x256xf32> to vector<4x256xf32>
    %106 = arith.mulf %104, %105 : vector<4x256xf32>
    %107 = arith.addf %101, %106 : vector<4x256xf32>
    %108 = vector.extract_strided_slice %70 {offsets = [0, 3], sizes = [4, 1], strides = [1, 1]} : vector<4x4xf32> to vector<4x1xf32>
    %109 = vector.extract_strided_slice %90 {offsets = [3, 0], sizes = [1, 256], strides = [1, 1]} : vector<4x256xf32> to vector<1x256xf32>
    %110 = vector.broadcast %108 : vector<4x1xf32> to vector<4x256xf32>
    %111 = vector.broadcast %109 : vector<1x256xf32> to vector<4x256xf32>
    %112 = arith.mulf %110, %111 : vector<4x256xf32>
    %113 = arith.addf %107, %112 : vector<4x256xf32>
    %114 = vector.extract_strided_slice %1 {offsets = [8, 0], sizes = [4, 4], strides = [1, 1]} : vector<12x4xf32> to vector<4x4xf32>
    %cst_22 = arith.constant dense<0.000000e+00> : vector<256xf32>
    %115 = vector.multi_reduction <add>, %113, %cst_22 [0] : vector<4x256xf32> to vector<256xf32>
    %116 = vector.shape_cast %115 : vector<256xf32> to vector<1x256xf32>
    %cst_23 = arith.constant 4.000000e+00 : f32
    %117 = vector.broadcast %cst_23 : f32 to vector<1x256xf32>
    %118 = arith.divf %116, %117 : vector<1x256xf32>
    %119 = vector.broadcast %118 : vector<1x256xf32> to vector<4x256xf32>
    %120 = arith.subf %113, %119 : vector<4x256xf32>
    %121 = arith.mulf %120, %120 : vector<4x256xf32>
    %cst_24 = arith.constant dense<0.000000e+00> : vector<256xf32>
    %122 = vector.multi_reduction <add>, %121, %cst_24 [0] : vector<4x256xf32> to vector<256xf32>
    %123 = vector.shape_cast %122 : vector<256xf32> to vector<1x256xf32>
    %cst_25 = arith.constant 4.000000e+00 : f32
    %124 = vector.broadcast %cst_25 : f32 to vector<1x256xf32>
    %125 = arith.divf %123, %124 : vector<1x256xf32>
    %cst_26 = arith.constant 9.99999974E-6 : f32
    %126 = vector.broadcast %cst_26 : f32 to vector<1x256xf32>
    %127 = arith.addf %125, %126 : vector<1x256xf32>
    %128 = math.rsqrt %127 : vector<1x256xf32>
    %129 = vector.broadcast %128 : vector<1x256xf32> to vector<4x256xf32>
    %130 = arith.mulf %120, %129 : vector<4x256xf32>
    %131 = vector.broadcast %7 : vector<4x1xf32> to vector<4x256xf32>
    %132 = arith.mulf %130, %131 : vector<4x256xf32>
    %133 = vector.broadcast %8 : vector<4x1xf32> to vector<4x256xf32>
    %134 = arith.addf %132, %133 : vector<4x256xf32>
    %135 = vector.extract_strided_slice %114 {offsets = [0, 0], sizes = [4, 1], strides = [1, 1]} : vector<4x4xf32> to vector<4x1xf32>
    %136 = vector.extract_strided_slice %134 {offsets = [0, 0], sizes = [1, 256], strides = [1, 1]} : vector<4x256xf32> to vector<1x256xf32>
    %137 = vector.broadcast %135 : vector<4x1xf32> to vector<4x256xf32>
    %138 = vector.broadcast %136 : vector<1x256xf32> to vector<4x256xf32>
    %139 = arith.mulf %137, %138 : vector<4x256xf32>
    %140 = vector.extract_strided_slice %114 {offsets = [0, 1], sizes = [4, 1], strides = [1, 1]} : vector<4x4xf32> to vector<4x1xf32>
    %141 = vector.extract_strided_slice %134 {offsets = [1, 0], sizes = [1, 256], strides = [1, 1]} : vector<4x256xf32> to vector<1x256xf32>
    %142 = vector.broadcast %140 : vector<4x1xf32> to vector<4x256xf32>
    %143 = vector.broadcast %141 : vector<1x256xf32> to vector<4x256xf32>
    %144 = arith.mulf %142, %143 : vector<4x256xf32>
    %145 = arith.addf %139, %144 : vector<4x256xf32>
    %146 = vector.extract_strided_slice %114 {offsets = [0, 2], sizes = [4, 1], strides = [1, 1]} : vector<4x4xf32> to vector<4x1xf32>
    %147 = vector.extract_strided_slice %134 {offsets = [2, 0], sizes = [1, 256], strides = [1, 1]} : vector<4x256xf32> to vector<1x256xf32>
    %148 = vector.broadcast %146 : vector<4x1xf32> to vector<4x256xf32>
    %149 = vector.broadcast %147 : vector<1x256xf32> to vector<4x256xf32>
    %150 = arith.mulf %148, %149 : vector<4x256xf32>
    %151 = arith.addf %145, %150 : vector<4x256xf32>
    %152 = vector.extract_strided_slice %114 {offsets = [0, 3], sizes = [4, 1], strides = [1, 1]} : vector<4x4xf32> to vector<4x1xf32>
    %153 = vector.extract_strided_slice %134 {offsets = [3, 0], sizes = [1, 256], strides = [1, 1]} : vector<4x256xf32> to vector<1x256xf32>
    %154 = vector.broadcast %152 : vector<4x1xf32> to vector<4x256xf32>
    %155 = vector.broadcast %153 : vector<1x256xf32> to vector<4x256xf32>
    %156 = arith.mulf %154, %155 : vector<4x256xf32>
    %157 = arith.addf %151, %156 : vector<4x256xf32>
    %158 = arith.addf %157, %69 : vector<4x256xf32>
    %c0_27 = arith.constant 0 : index
    %c0_28 = arith.constant 0 : index
    %159 = vector.load %arg6[%c0_27, %c0_28] : memref<4x256xf32, #tpu.memory_space<vmem>>, vector<4x256xf32>
    tpu.vector_store %arg6[%c0_27, %c0_28], %158 {strides = array<i32>} : memref<4x256xf32, #tpu.memory_space<vmem>>, vector<4x256xf32>,
    return
  }
  func.func @transform_0(%arg0: i32) -> (i32, i32) {
    %c0_i32 = arith.constant 0 : i32
    %c0_i32_0 = arith.constant 0 : i32
    return %c0_i32, %arg0 : i32, i32
  }
  func.func @transform_1(%arg0: i32) -> (i32, i32) {
    %c0_i32 = arith.constant 0 : i32
    %c0_i32_0 = arith.constant 0 : i32
    %c0_i32_1 = arith.constant 0 : i32
    return %c0_i32, %c0_i32_0 : i32, i32
  }
  func.func @transform_2(%arg0: i32) -> (i32, i32) {
    %c0_i32 = arith.constant 0 : i32
    %c0_i32_0 = arith.constant 0 : i32
    %c0_i32_1 = arith.constant 0 : i32
    return %c0_i32, %c0_i32_0 : i32, i32
  }
  func.func @transform_3(%arg0: i32) -> (i32, i32) {
    %c0_i32 = arith.constant 0 : i32
    %c0_i32_0 = arith.constant 0 : i32
    %c0_i32_1 = arith.constant 0 : i32
    return %c0_i32, %c0_i32_0 : i32, i32
  }
  func.func @transform_4(%arg0: i32) -> (i32, i32) {
    %c0_i32 = arith.constant 0 : i32
    %c0_i32_0 = arith.constant 0 : i32
    %c0_i32_1 = arith.constant 0 : i32
    return %c0_i32, %c0_i32_0 : i32, i32
  }
  func.func @transform_5(%arg0: i32) -> (i32, i32) {
    %c0_i32 = arith.constant 0 : i32
    %c0_i32_0 = arith.constant 0 : i32
    return %c0_i32, %arg0 : i32, i32
  }
}

</mosaic_0001>

<llo_original>
// kernel: tpu_custom_call.1
$region0: #{tpu_custom_call.1}
  #allocation0 [shape = 'u32[]', space=smem, size = 0x4, offset = 0x4, fixed_abs, tag = 'smem constant byte address 0x4 - core index']
  #allocation1 [shape = 'u32[144,128]{1,0:T(1,128)}', space=vmem, size = 0x12000, scoped, tag = 'internal scratch']
  %s0 = inlined_call_operand.vmem [shape: f32[4,512], index: 0, kind: input, shape index: {}]
  %s1 = inlined_call_operand.hbm [shape: bf16[4,512], index: 1, kind: input, shape index: {}]
  %s2 = inlined_call_operand.hbm [shape: bf16[4,512], index: 2, kind: input, shape index: {}]
  %s3 = inlined_call_operand.vmem [shape: f32[12,4], index: 3, kind: input, shape index: {}]
  %s4 = inlined_call_operand.vmem [shape: f32[4,6], index: 4, kind: input, shape index: {}]
  %s5 = inlined_call_operand.hbm [shape: f32[4,512], index: 5, kind: output, shape index: {}]
  %s6 = sld [smem:[#allocation0]]
  $region61: #{tpu_custom_call.1} parent=0
    _
  %s8 = ssub.s32 1, %s6
  %s9 = scalar_select 0, %s8, %s6
  $region1: #{tpu_custom_call.1} parent=0
    #allocation2 [shape = 'u8[4096]{0}', space=vmem, size = 0x1000, scoped, tag = 'input window, operand 1, single buffered']
    #allocation3 [shape = 's32[2]{0}', space=sflag, size = 0x8, scoped, tag = 'scoped memory for tpu_custom_call.1']
    #allocation4 [shape = 's32[2]{0}', space=sflag, size = 0x8, scoped, tag = 'scoped memory for tpu_custom_call.1']
    #allocation5 [shape = 'u8[4096]{0}', space=vmem, size = 0x1000, scoped, tag = 'input window, operand 2, single buffered']
    #allocation6 [shape = 's32[1]{0}', space=sflag, size = 0x4, scoped, tag = 'scoped memory for tpu_custom_call.1']
    #allocation7 [shape = 'u8[8192]{0}', space=vmem, size = 0x2000, scoped, tag = 'output window, operand 0']
    %10 = vsyncpa [#allocation3], 0
    %11 = vsyncpa [#allocation6], 0
    %12 = vsyncpa [#allocation4], 0
    %s13 = scalar_lea.sflag [#allocation4], 1
    %14 = vsyncpa %s13, 0
    loop: start=0, step=1, limit=4
    $region2: #{tpu_custom_call.1} parent=1 // loop_pre_header
      _
    $region3: #{tpu_custom_call.1} parent=1 // loop_header
      %s16 = sphi 0, %s20
      %p17 = scmp.ge.s32.totalorder %s16, 4
      %s26 = sphi 0, %s28
      %s29 = sphi 0, %s26
      %s30 = sphi 0, %s29
      %s46 = sphi 0, %s30
      %s50 = sphi 0, %s50
      %s52 = sphi 0, %s50
      %s53 = sphi 0, %s52
      %s67 = sphi 0, %s53
      %s71 = sphi 0, %s71
      %s73 = sphi 0, %s71
      %s74 = sphi 0, %s73
      %s88 = sphi 0, %s74
      %s92 = sphi 0, %s92
      %s94 = sphi 0, %s92
      %s95 = sphi 0, %s94
      %s109 = sphi 0, %s95
      %s113 = sphi 0, %s113
      %s115 = sphi 0, %s113
      %s116 = sphi 0, %s115
      %s130 = sphi 0, %s116
      %s136 = sphi 0, %s138
      %s139 = sphi 0, %s136
      %s140 = sphi 0, %s139
      %s156 = sphi 0, %s140
    $region4: #{tpu_custom_call.1} parent=1 // loop_header_branch
      %19 = sbr.rel (%p17) target = $region8
    $region5: #{tpu_custom_call.1} parent=1 // loop_body
      %s21 = ssub.s32 %s16, 1
      %s22 = ssub.s32 %s16, 2
      %s23 = sadd.s32 %s16, 1
      %s24 = ssub.s32 %s16, %s23
      %p25 = scmp.eq.s32.totalorder %s24, 0
      %s27 = sadd.s32 %s26, 1
      %s28 = scalar_select %p25, %s26, %s27
      %p31 = pneg %p25
      %p32 = scmp.eq.s32.totalorder %s16, 1
      %p33 = por %p31, %p32
      %p34 = scmp.ne.s32.totalorder %s26, %s29
      %p35 = scmp.eq.s32.totalorder %s16, 0
      %p36 = por %p34, %p35
      %p37 = scmp.ne.s32.totalorder %s26, %s29
      %p38 = scmp.eq.s32.totalorder %s21, 1
      %p39 = por %p37, %p38
      %p40 = scmp.ne.s32.totalorder %s29, %s30
      %p41 = scmp.eq.s32.totalorder %s21, 0
      %p42 = por %p40, %p41
      %p43 = scmp.ne.s32.totalorder %s29, %s30
      %p44 = scmp.eq.s32.totalorder %s22, 1
      %p45 = por %p43, %p44
      %p47 = scmp.ne.s32.totalorder %s30, %s46
      %p48 = scmp.eq.s32.totalorder %s22, 0
      %p49 = por %p47, %p48
      %s51 = sadd.s32 %s50, 1
      %p54 = scmp.eq.s32.totalorder %s16, 1
      %p55 = scmp.ne.s32.totalorder %s50, %s52
      %p56 = scmp.eq.s32.totalorder %s16, 0
      %p57 = por %p55, %p56
      %p58 = scmp.ne.s32.totalorder %s50, %s52
      %p59 = scmp.eq.s32.totalorder %s21, 1
      %p60 = por %p58, %p59
      %p61 = scmp.ne.s32.totalorder %s52, %s53
      %p62 = scmp.eq.s32.totalorder %s21, 0
      %p63 = por %p61, %p62
      %p64 = scmp.ne.s32.totalorder %s52, %s53
      %p65 = scmp.eq.s32.totalorder %s22, 1
      %p66 = por %p64, %p65
      %p68 = scmp.ne.s32.totalorder %s53, %s67
      %p69 = scmp.eq.s32.totalorder %s22, 0
      %p70 = por %p68, %p69
      %s72 = sadd.s32 %s71, 1
      %p75 = scmp.eq.s32.totalorder %s16, 1
      %p76 = scmp.ne.s32.totalorder %s71, %s73
      %p77 = scmp.eq.s32.totalorder %s16, 0
      %p78 = por %p76, %p77
      %p79 = scmp.ne.s32.totalorder %s71, %s73
      %p80 = scmp.eq.s32.totalorder %s21, 1
      %p81 = por %p79, %p80
      %p82 = scmp.ne.s32.totalorder %s73, %s74
      %p83 = scmp.eq.s32.totalorder %s21, 0
      %p84 = por %p82, %p83
      %p85 = scmp.ne.s32.totalorder %s73, %s74
      %p86 = scmp.eq.s32.totalorder %s22, 1
      %p87 = por %p85, %p86
      %p89 = scmp.ne.s32.totalorder %s74, %s88
      %p90 = scmp.eq.s32.totalorder %s22, 0
      %p91 = por %p89, %p90
      %s93 = sadd.s32 %s92, 1
      %p96 = scmp.eq.s32.totalorder %s16, 1
      %p97 = scmp.ne.s32.totalorder %s92, %s94
      %p98 = scmp.eq.s32.totalorder %s16, 0
      %p99 = por %p97, %p98
      %p100 = scmp.ne.s32.totalorder %s92, %s94
      %p101 = scmp.eq.s32.totalorder %s21, 1
      %p102 = por %p100, %p101
      %p103 = scmp.ne.s32.totalorder %s94, %s95
      %p104 = scmp.eq.s32.totalorder %s21, 0
      %p105 = por %p103, %p104
      %p106 = scmp.ne.s32.totalorder %s94, %s95
      %p107 = scmp.eq.s32.totalorder %s22, 1
      %p108 = por %p106, %p107
      %p110 = scmp.ne.s32.totalorder %s95, %s109
      %p111 = scmp.eq.s32.totalorder %s22, 0
      %p112 = por %p110, %p111
      %s114 = sadd.s32 %s113, 1
      %p117 = scmp.eq.s32.totalorder %s16, 1
      %p118 = scmp.ne.s32.totalorder %s113, %s115
      %p119 = scmp.eq.s32.totalorder %s16, 0
      %p120 = por %p118, %p119
      %p121 = scmp.ne.s32.totalorder %s113, %s115
      %p122 = scmp.eq.s32.totalorder %s21, 1
      %p123 = por %p121, %p122
      %p124 = scmp.ne.s32.totalorder %s115, %s116
      %p125 = scmp.eq.s32.totalorder %s21, 0
      %p126 = por %p124, %p125
      %p127 = scmp.ne.s32.totalorder %s115, %s116
      %p128 = scmp.eq.s32.totalorder %s22, 1
      %p129 = por %p127, %p128
      %p131 = scmp.ne.s32.totalorder %s116, %s130
      %p132 = scmp.eq.s32.totalorder %s22, 0
      %p133 = por %p131, %p132
      %s134 = ssub.s32 %s16, %s23
      %p135 = scmp.eq.s32.totalorder %s134, 0
      %s137 = sadd.s32 %s136, 1
      %s138 = scalar_select %p135, %s136, %s137
      %p141 = pneg %p135
      %p142 = scmp.eq.s32.totalorder %s16, 1
      %p143 = por %p141, %p142
      %p144 = scmp.ne.s32.totalorder %s136, %s139
      %p145 = scmp.eq.s32.totalorder %s16, 0
      %p146 = por %p144, %p145
      %p147 = scmp.ne.s32.totalorder %s136, %s139
      %p148 = scmp.eq.s32.totalorder %s21, 1
      %p149 = por %p147, %p148
      %p150 = scmp.ne.s32.totalorder %s139, %s140
      %p151 = scmp.eq.s32.totalorder %s21, 0
      %p152 = por %p150, %p151
      %p153 = scmp.ne.s32.totalorder %s139, %s140
      %p154 = scmp.eq.s32.totalorder %s22, 1
      %p155 = por %p153, %p154
      %p157 = scmp.ne.s32.totalorder %s140, %s156
      %p158 = scmp.eq.s32.totalorder %s22, 0
      %p159 = por %p157, %p158
      %p160 = scmp.le.s32.totalorder 1, %s16
      %p161 = scmp.lt.s32.totalorder %s16, 3
      %p162 = pnand %p160, %p161
      %p163 = pneg %p162
      // Predicated region
      $region9: #{tpu_custom_call.1} parent=5 // pred_check
        _
      $region10: #{tpu_custom_call.1} parent=5 // pred_check_branch
        %165 = sbr.rel (%p162) target = $region12
      $region11: #{tpu_custom_call.1} parent=5 // pred_region
        %s166 = ssub.s32 %s16, 1
        // Predicated region
        $region13: #{tpu_custom_call.1} parent=11 // pred_check
          %p167 = pneg %p63
        $region14: #{tpu_custom_call.1} parent=11 // pred_check_branch
          %169 = sbr.rel (%p167) target = $region16
        $region15: #{tpu_custom_call.1} parent=11 // pred_region
          %s171 = ssub.s32 128, 128
          %172 = vsyncadd [#allocation3], %s171
          %s174 = sshll.u32 [#allocation2], 4
          %s175 = int_to_ptr.vmem [resolvable:$true] %s174
          %177 = dma.hbm_to_vmem [thread:$0]  %s1, 128, %s175, [#allocation3]
        $region16: #{tpu_custom_call.1} parent=11 // pred_fallthru
          _
        // Predicated region
        $region17: #{tpu_custom_call.1} parent=11 // pred_check
          %p178 = pneg %p84
        $region18: #{tpu_custom_call.1} parent=11 // pred_check_branch
          %180 = sbr.rel (%p178) target = $region20
        $region19: #{tpu_custom_call.1} parent=11 // pred_region
          %s182 = ssub.s32 128, 128
          %183 = vsyncadd [#allocation6], %s182
          %s185 = sshll.u32 [#allocation5], 4
          %s186 = int_to_ptr.vmem [resolvable:$true] %s185
          %188 = dma.hbm_to_vmem [thread:$0]  %s2, 128, %s186, [#allocation6]
        $region20: #{tpu_custom_call.1} parent=11 // pred_fallthru
          _
        // Predicated region
        $region21: #{tpu_custom_call.1} parent=11 // pred_check
          %p189 = pneg %p105
        $region22: #{tpu_custom_call.1} parent=11 // pred_check_branch
          %191 = sbr.rel (%p189) target = $region24
        $region23: #{tpu_custom_call.1} parent=11 // pred_region
          _
        $region24: #{tpu_custom_call.1} parent=11 // pred_fallthru
          _
        // Predicated region
        $region25: #{tpu_custom_call.1} parent=11 // pred_check
          %p192 = pneg %p126
        $region26: #{tpu_custom_call.1} parent=11 // pred_check_branch
          %194 = sbr.rel (%p192) target = $region28
        $region27: #{tpu_custom_call.1} parent=11 // pred_region
          _
        $region28: #{tpu_custom_call.1} parent=11 // pred_fallthru
          _
      $region12: #{tpu_custom_call.1} parent=5 // pred_fallthru
        _
      %p195 = scmp.lt.s32.totalorder %s16, 2
      // Predicated region
      $region29: #{tpu_custom_call.1} parent=5 // pred_check
        %p196 = pneg %p195
      $region30: #{tpu_custom_call.1} parent=5 // pred_check_branch
        %198 = sbr.rel (%p196) target = $region32
      $region31: #{tpu_custom_call.1} parent=5 // pred_region
        // Predicated region
        $region33: #{tpu_custom_call.1} parent=31 // pred_check
          %p199 = pneg %p36
        $region34: #{tpu_custom_call.1} parent=31 // pred_check_branch
          %201 = sbr.rel (%p199) target = $region36
        $region35: #{tpu_custom_call.1} parent=31 // pred_region
          %s202 = smul.u32 2, %s16
          %p203 = scmp.lt.s32.totalorder %s202, 3
          %s204 = scalar_select %p203, %s202, 3
          %s205 = smul.addr %s204, 4
          %s206 = scalar_lea.vmem %s0, %s205
          %s207 = smul.u32 2, %s16
        $region36: #{tpu_custom_call.1} parent=31 // pred_fallthru
          _
      $region32: #{tpu_custom_call.1} parent=5 // pred_fallthru
        _
      %p208 = scmp.le.s32.totalorder 1, %s16
      %p209 = scmp.lt.s32.totalorder %s16, 3
      %p210 = pnand %p208, %p209
      %p211 = pneg %p210
      // Predicated region
      $region37: #{tpu_custom_call.1} parent=5 // pred_check
        _
      $region38: #{tpu_custom_call.1} parent=5 // pred_check_branch
        %213 = sbr.rel (%p210) target = $region40
      $region39: #{tpu_custom_call.1} parent=5 // pred_region
        %s214 = ssub.s32 %s16, 1
        // Predicated region
        $region41: #{tpu_custom_call.1} parent=39 // pred_check
          %p215 = pneg %p63
        $region42: #{tpu_custom_call.1} parent=39 // pred_check_branch
          %217 = sbr.rel (%p215) target = $region44
        $region43: #{tpu_custom_call.1} parent=39 // pred_region
          %218 = dma.done [#allocation3], 128
        $region44: #{tpu_custom_call.1} parent=39 // pred_fallthru
          _
        // Predicated region
        $region45: #{tpu_custom_call.1} parent=39 // pred_check
          %p219 = pneg %p84
        $region46: #{tpu_custom_call.1} parent=39 // pred_check_branch
          %221 = sbr.rel (%p219) target = $region48
        $region47: #{tpu_custom_call.1} parent=39 // pred_region
          %222 = dma.done [#allocation6], 128
        $region48: #{tpu_custom_call.1} parent=39 // pred_fallthru
          _
        %s223 = smul.u32 2, %s21
        %p224 = scmp.lt.s32.totalorder %s223, 3
        %s225 = scalar_select %p224, %s223, 3
        %s226 = smul.addr %s225, 4
        %s227 = scalar_lea.vmem %s0, %s226
        %p228 = pneg %p42
        %p229 = pneg %p39
        %p230 = pneg %p63
        %p231 = pneg %p60
        %p232 = pneg %p84
        %p233 = pneg %p81
        %p234 = pneg %p105
        %p235 = pneg %p102
        %p236 = pneg %p126
        %p237 = pneg %p123
        %p238 = pneg %p152
        %p239 = pneg %p149
        %s240 = sand.u32 %s139, 1
        %s241 = scalar_lea.sflag [#allocation4], %s240
        %s242 = sand.u32 %s139, 1
        %s243 = smul.addr %s242, 8
        %s244 = scalar_lea.vmem [#allocation7], %s243
        %s245 = smul.u32 2, %s21
        %p246 = scmp.lt.s32.totalorder %s245, 3
        %s247 = scalar_select %p246, %s245, 3
        %s248 = smul.addr %s247, 4
        %s249 = scalar_lea.vmem %s0, %s248
        %s250 = smul.u32 2, %s21
        %s251 = smul.u32 2, %s21
        %v253 = vld [vmem:[%s249] sm:$0xff]
        %v254 = vld [vmem:[%s3] sm:$0xff]
        %v255 = vld [vmem:[%s3 + $0x8] sm:$0xf]
        %v256 = vld [vmem:[%s4] sm:$0xf]
        %v258 = vcombine.high %v253, %v253
        %vm260 = vcmask 1043456
        %v261 = vsel %vm260, %v253, 0.0
        %v262 = vrot.slane %v261, 4
        %v263 = vadd.f32 %v261, %v262
        %v264 = vrot.slane %v263, 2
        %v265 = vadd.f32 %v263, %v264
        %v266 = vrot.slane %v265, 1
        %v267 = vadd.f32 %v265, %v266
        %v268 = vsel %vm260, %v258, 0.0
        %v269 = vrot.slane %v268, 4
        %v270 = vadd.f32 %v268, %v269
        %v271 = vrot.slane %v270, 2
        %v272 = vadd.f32 %v270, %v271
        %v273 = vrot.slane %v272, 1
        %v274 = vadd.f32 %v272, %v273
        %v275 = vrcp.pop 4.0
        %v276 = vmul.f32 %v267, %v275
        %v277 = vmul.f32 %v274, %v275
        %v280 = vcombine.low %v276, %v277
        %v282 = vsub.f32 %v253, %v280
        %v283 = vmul.f32 %v282, %v282
        %v285 = vcombine.high %v283, %v283
        %v287 = vsel %vm260, %v283, 0.0
        %v288 = vrot.slane %v287, 4
        %v289 = vadd.f32 %v287, %v288
        %v290 = vrot.slane %v289, 2
        %v291 = vadd.f32 %v289, %v290
        %v292 = vrot.slane %v291, 1
        %v293 = vadd.f32 %v291, %v292
        %v294 = vsel %vm260, %v285, 0.0
        %v295 = vrot.slane %v294, 4
        %v296 = vadd.f32 %v294, %v295
        %v297 = vrot.slane %v296, 2
        %v298 = vadd.f32 %v296, %v297
        %v299 = vrot.slane %v298, 1
        %v300 = vadd.f32 %v298, %v299
        %v301 = vmul.f32 %v293, %v275
        %v302 = vmul.f32 %v300, %v275
        %v303 = vadd.f32 %v301, 1e-05
        %v304 = vadd.f32 %v302, 1e-05
        %v305 = vrsqrt.pop %v303
        %v306 = vrsqrt.pop %v304
        %v309 = vcombine.low %v305, %v306
        %v311 = vmul.f32 %v282, %v309
        %313 = vset.pattern.permute.xlu0 0
        %314 = vperm.xlu0 %313, %v256
        %v315 = vpop.permute.xlu0 %314
        %v317 = vunpack.c.l.s4 839922192
        %v318 = vunpack.c.0.s8 %v317
        %v319 = vlaneseq
        %v320 = vshrl.u32 %v319, 7
        %v321 = vsub.s32 %v318, %v320
        %v322 = vrot.slane %v315, %v321
        %v324 = vmul.f32 %v311, %v322
        %325 = vset.pattern.permute.xlu0 1
        %326 = vperm.xlu0 %325, %v256
        %v327 = vpop.permute.xlu0 %326
        %v329 = vunpack.c.l.s4 839922192
        %v330 = vunpack.c.0.s8 %v329
        %v331 = vlaneseq
        %v332 = vshrl.u32 %v331, 7
        %v333 = vsub.s32 %v330, %v332
        %v334 = vrot.slane %v327, %v333
        %v336 = vadd.f32 %v324, %v334
        %338 = vset.pattern.permute.xlu0 0
        %339 = vperm.xlu0 %338, %v254
        %v340 = vpop.permute.xlu0 %339
        %v343 = vlaneseq
        %v344 = vshrl.u32 %v343, 7
        %v345 = vsub.s32 0, %v344
        %v346 = vrot.slane %v336, %v345
        %v347 = vlaneseq
        %v348 = vshrl.u32 %v347, 7
        %v349 = vsub.s32 4, %v348
        %v350 = vrot.slane %v336, %v349
        %v353 = vlaneseq
        %v354 = vshrl.u32 %v353, 7
        %v355 = vsub.s32 0, %v354
        %v356 = vrot.slane %v346, %v355
        %v357 = vlaneseq
        %v358 = vshrl.u32 %v357, 7
        %v359 = vsub.s32 0, %v358
        %v360 = vrot.slane %v350, %v359
        %v361 = vmul.f32 %v340, %v356
        %v362 = vmul.f32 %v340, %v360
        %363 = vset.pattern.permute.xlu0 1
        %364 = vperm.xlu0 %363, %v254
        %v365 = vpop.permute.xlu0 %364
        %v367 = vlaneseq
        %v368 = vshrl.u32 %v367, 7
        %v369 = vsub.s32 1, %v368
        %v370 = vrot.slane %v336, %v369
        %v371 = vlaneseq
        %v372 = vshrl.u32 %v371, 7
        %v373 = vsub.s32 5, %v372
        %v374 = vrot.slane %v336, %v373
        %v377 = vlaneseq
        %v378 = vshrl.u32 %v377, 7
        %v379 = vsub.s32 1, %v378
        %v380 = vrot.slane %v370, %v379
        %v381 = vlaneseq
        %v382 = vshrl.u32 %v381, 7
        %v383 = vsub.s32 1, %v382
        %v384 = vrot.slane %v374, %v383
        %v385 = vmul.f32 %v365, %v380
        %v386 = vmul.f32 %v365, %v384
        %v387 = vadd.f32 %v361, %v385
        %v388 = vadd.f32 %v362, %v386
        %389 = vset.pattern.permute.xlu0 2
        %390 = vperm.xlu0 %389, %v254
        %v391 = vpop.permute.xlu0 %390
        %v393 = vlaneseq
        %v394 = vshrl.u32 %v393, 7
        %v395 = vsub.s32 2, %v394
        %v396 = vrot.slane %v336, %v395
        %v397 = vlaneseq
        %v398 = vshrl.u32 %v397, 7
        %v399 = vsub.s32 6, %v398
        %v400 = vrot.slane %v336, %v399
        %v403 = vlaneseq
        %v404 = vshrl.u32 %v403, 7
        %v405 = vsub.s32 2, %v404
        %v406 = vrot.slane %v396, %v405
        %v407 = vlaneseq
        %v408 = vshrl.u32 %v407, 7
        %v409 = vsub.s32 2, %v408
        %v410 = vrot.slane %v400, %v409
        %v411 = vmul.f32 %v391, %v406
        %v412 = vmul.f32 %v391, %v410
        %v413 = vadd.f32 %v387, %v411
        %v414 = vadd.f32 %v388, %v412
        %415 = vset.pattern.permute.xlu0 3
        %416 = vperm.xlu0 %415, %v254
        %v417 = vpop.permute.xlu0 %416
        %v419 = vlaneseq
        %v420 = vshrl.u32 %v419, 7
        %v421 = vsub.s32 3, %v420
        %v422 = vrot.slane %v336, %v421
        %v423 = vlaneseq
        %v424 = vshrl.u32 %v423, 7
        %v425 = vsub.s32 7, %v424
        %v426 = vrot.slane %v336, %v425
        %v429 = vlaneseq
        %v430 = vshrl.u32 %v429, 7
        %v431 = vsub.s32 3, %v430
        %v432 = vrot.slane %v422, %v431
        %v433 = vlaneseq
        %v434 = vshrl.u32 %v433, 7
        %v435 = vsub.s32 3, %v434
        %v436 = vrot.slane %v426, %v435
        %v437 = vmul.f32 %v417, %v432
        %v438 = vmul.f32 %v417, %v436
        %v439 = vadd.f32 %v413, %v437
        %v440 = vadd.f32 %v414, %v438
        %v441 = vld [vmem:[#allocation2] sm:$0xff]
        %v442 = vpack.c.bf16 %v439, %v439
        %v443 = vpack.c.bf16 %v440, %v440
        %v445 = vcombine.high %v441, %v441
        %v447 = vunpack.c.l.s4 1983009808
        %v448 = vunpack.c.0.s8 %v447
        %v449 = vlaneseq
        %v450 = vshrl.u32 %v449, 7
        %v451 = vsub.s32 %v448, %v450
        %v452 = vrot.slane %v441, %v451
        %v454 = vunpack.c.l.s4 1983009808
        %v455 = vunpack.c.0.s8 %v454
        %v456 = vlaneseq
        %v457 = vshrl.u32 %v456, 7
        %v458 = vsub.s32 %v455, %v457
        %v459 = vrot.slane %v445, %v458
        %v460 = vcombine.high %v452, %v452
        %v461 = vcombine.high %v459, %v459
        %466 = vxpose.xlu0.c.b16.start [1/8] %v452, 128
        %467 = vxpose.xlu0.c.b16.cont [2/8] 0, 128
        %468 = vxpose.xlu0.c.b16.cont [3/8] 0, 128
        %469 = vxpose.xlu0.c.b16.cont [4/8] 0, 128
        %470 = vxpose.xlu0.c.b16.cont [5/8] 0, 128
        %471 = vxpose.xlu0.c.b16.cont [6/8] 0, 128
        %472 = vxpose.xlu0.c.b16.cont [7/8] 0, 128
        %473 = vxpose.xlu0.c.b16.end [8/8] 0, 128
        %v474 = vpop.trf.xlu0
        %v475 = vpop.trf.xlu0
        %v476 = vpop.trf.xlu0
        %v477 = vpop.trf.xlu0
        %v478 = vpop.trf.xlu0
        %v479 = vpop.trf.xlu0
        %v480 = vpop.trf.xlu0
        %v481 = vpop.trf.xlu0
        %482 = vxpose.xlu0.c.b16.start [1/8] %v460, 128
        %483 = vxpose.xlu0.c.b16.cont [2/8] 0, 128
        %484 = vxpose.xlu0.c.b16.cont [3/8] 0, 128
        %485 = vxpose.xlu0.c.b16.cont [4/8] 0, 128
        %486 = vxpose.xlu0.c.b16.cont [5/8] 0, 128
        %487 = vxpose.xlu0.c.b16.cont [6/8] 0, 128
        %488 = vxpose.xlu0.c.b16.cont [7/8] 0, 128
        %489 = vxpose.xlu0.c.b16.end [8/8] 0, 128
        %v490 = vpop.trf.xlu0
        %v491 = vpop.trf.xlu0
        %v492 = vpop.trf.xlu0
        %v493 = vpop.trf.xlu0
        %v494 = vpop.trf.xlu0
        %v495 = vpop.trf.xlu0
        %v496 = vpop.trf.xlu0
        %v497 = vpop.trf.xlu0
        %498 = vxpose.xlu0.c.b16.start [1/8] %v459, 128
        %499 = vxpose.xlu0.c.b16.cont [2/8] 0, 128
        %500 = vxpose.xlu0.c.b16.cont [3/8] 0, 128
        %501 = vxpose.xlu0.c.b16.cont [4/8] 0, 128
        %502 = vxpose.xlu0.c.b16.cont [5/8] 0, 128
        %503 = vxpose.xlu0.c.b16.cont [6/8] 0, 128
        %504 = vxpose.xlu0.c.b16.cont [7/8] 0, 128
        %505 = vxpose.xlu0.c.b16.end [8/8] 0, 128
        %v506 = vpop.trf.xlu0
        %v507 = vpop.trf.xlu0
        %v508 = vpop.trf.xlu0
        %v509 = vpop.trf.xlu0
        %v510 = vpop.trf.xlu0
        %v511 = vpop.trf.xlu0
        %v512 = vpop.trf.xlu0
        %v513 = vpop.trf.xlu0
        %514 = vxpose.xlu0.c.b16.start [1/8] %v461, 128
        %515 = vxpose.xlu0.c.b16.cont [2/8] 0, 128
        %516 = vxpose.xlu0.c.b16.cont [3/8] 0, 128
        %517 = vxpose.xlu0.c.b16.cont [4/8] 0, 128
        %518 = vxpose.xlu0.c.b16.cont [5/8] 0, 128
        %519 = vxpose.xlu0.c.b16.cont [6/8] 0, 128
        %520 = vxpose.xlu0.c.b16.cont [7/8] 0, 128
        %521 = vxpose.xlu0.c.b16.end [8/8] 0, 128
        %v522 = vpop.trf.xlu0
        %v523 = vpop.trf.xlu0
        %v524 = vpop.trf.xlu0
        %v525 = vpop.trf.xlu0
        %v526 = vpop.trf.xlu0
        %v527 = vpop.trf.xlu0
        %v528 = vpop.trf.xlu0
        %v529 = vpop.trf.xlu0
        %vm530 = vcmask 31744
        %v532 = vsel %vm530, %v474, 0
        %v535 = vsel %vm530, %v475, 0
        %v538 = vsel %vm530, %v476, 0
        %v541 = vsel %vm530, %v477, 0
        %v544 = vsel %vm530, %v478, 0
        %v547 = vsel %vm530, %v479, 0
        %v550 = vsel %vm530, %v480, 0
        %v553 = vsel %vm530, %v481, 0
        %v556 = vsel %vm530, %v490, 0
        %v559 = vsel %vm530, %v491, 0
        %v562 = vsel %vm530, %v492, 0
        %v565 = vsel %vm530, %v493, 0
        %v568 = vsel %vm530, %v494, 0
        %v571 = vsel %vm530, %v495, 0
        %v574 = vsel %vm530, %v496, 0
        %v577 = vsel %vm530, %v497, 0
        %v580 = vsel %vm530, %v506, 0
        %v583 = vsel %vm530, %v507, 0
        %v586 = vsel %vm530, %v508, 0
        %v589 = vsel %vm530, %v509, 0
        %v592 = vsel %vm530, %v510, 0
        %v595 = vsel %vm530, %v511, 0
        %v598 = vsel %vm530, %v512, 0
        %v601 = vsel %vm530, %v513, 0
        %v604 = vsel %vm530, %v522, 0
        %v607 = vsel %vm530, %v523, 0
        %v610 = vsel %vm530, %v524, 0
        %v613 = vsel %vm530, %v525, 0
        %v616 = vsel %vm530, %v526, 0
        %v619 = vsel %vm530, %v527, 0
        %v622 = vsel %vm530, %v528, 0
        %v625 = vsel %vm530, %v529, 0
        %vm627 = vcmask 1041408
        %v629 = vsel %vm627, %v442, 0
        %v632 = vsel %vm627, %v443, 0
        %634 = vmatprep.subr.bf16.mxu0 0
        %635 = vmatpush1.bf16.msra.mxu0 0
        %636 = vmatprep.subr.bf16.mxu0 0
        %637 = vmatpush1.bf16.msra.mxu0 0
        %638 = vmatprep.subr.bf16.mxu0 0
        %639 = vmatpush1.bf16.msra.mxu0 0
        %640 = vmatprep.subr.bf16.mxu0 0
        %641 = vmatpush1.bf16.msra.mxu0 0
        %642 = vmatprep.subr.bf16.mxu0 0
        %643 = vmatpush1.bf16.msra.mxu0 0
        %644 = vmatprep.subr.bf16.mxu0 0
        %645 = vmatpush1.bf16.msra.mxu0 0
        %646 = vmatprep.subr.bf16.mxu0 0
        %647 = vmatpush1.bf16.msra.mxu0 0
        %648 = vmatprep.subr.bf16.mxu0 %v632
        %649 = vmatpush1.bf16.msra.mxu0 %v629
        %650 = vmatprep.subr.bf16.mxu0 0
        %651 = vmatpush2.bf16.msra.mxu0 0
        %652 = vmatprep.subr.bf16.mxu0 0
        %653 = vmatpush2.bf16.msra.mxu0 0
        %654 = vmatprep.subr.bf16.mxu0 0
        %655 = vmatpush2.bf16.msra.mxu0 0
        %656 = vmatprep.subr.bf16.mxu0 0
        %657 = vmatpush2.bf16.msra.mxu0 0
        %658 = vmatprep.subr.bf16.mxu0 0
        %659 = vmatpush2.bf16.msra.mxu0 0
        %660 = vmatprep.subr.bf16.mxu0 0
        %661 = vmatpush2.bf16.msra.mxu0 0
        %662 = vmatprep.subr.bf16.mxu0 0
        %663 = vmatpush2.bf16.msra.mxu0 0
        %664 = vmatprep.subr.bf16.mxu0 0
        %665 = vmatpush2.bf16.msra.mxu0 0
        %666 = vmatprep.mubr.bf16.mxu0 0
        %667 = vmatmul.mubr.bf16.gmra.mxu0 %v532
        %v668 = vpop.f32.mrf.mxu0
        %v669 = vadd.f32 0.0, %v668
        %v670 = vpop.f32.mrf.mxu0
        %v671 = vadd.f32 0.0, %v670
        %v672 = vpop.f32.mrf.mxu0
        %v673 = vadd.f32 0.0, %v672
        %v674 = vpop.f32.mrf.mxu0
        %v675 = vadd.f32 0.0, %v674
        %676 = vmatprep.mubr.bf16.mxu0 0
        %677 = vmatmul.mubr.bf16.gmra.mxu0 %v535
        %v678 = vpop.f32.mrf.mxu0
        %v679 = vadd.f32 0.0, %v678
        %v680 = vpop.f32.mrf.mxu0
        %v681 = vadd.f32 0.0, %v680
        %v682 = vpop.f32.mrf.mxu0
        %v683 = vadd.f32 0.0, %v682
        %v684 = vpop.f32.mrf.mxu0
        %v685 = vadd.f32 0.0, %v684
        %686 = vmatprep.mubr.bf16.mxu0 0
        %687 = vmatmul.mubr.bf16.gmra.mxu0 %v538
        %v688 = vpop.f32.mrf.mxu0
        %v689 = vadd.f32 0.0, %v688
        %v690 = vpop.f32.mrf.mxu0
        %v691 = vadd.f32 0.0, %v690
        %v692 = vpop.f32.mrf.mxu0
        %v693 = vadd.f32 0.0, %v692
        %v694 = vpop.f32.mrf.mxu0
        %v695 = vadd.f32 0.0, %v694
        %696 = vmatprep.mubr.bf16.mxu0 0
        %697 = vmatmul.mubr.bf16.gmra.mxu0 %v541
        %v698 = vpop.f32.mrf.mxu0
        %v699 = vadd.f32 0.0, %v698
        %v700 = vpop.f32.mrf.mxu0
        %v701 = vadd.f32 0.0, %v700
        %v702 = vpop.f32.mrf.mxu0
        %v703 = vadd.f32 0.0, %v702
        %v704 = vpop.f32.mrf.mxu0
        %v705 = vadd.f32 0.0, %v704
        %706 = vmatprep.mubr.bf16.mxu0 0
        %707 = vmatmul.mubr.bf16.gmra.mxu0 %v544
        %v708 = vpop.f32.mrf.mxu0
        %v709 = vadd.f32 0.0, %v708
        %v710 = vpop.f32.mrf.mxu0
        %v711 = vadd.f32 0.0, %v710
        %v712 = vpop.f32.mrf.mxu0
        %v713 = vadd.f32 0.0, %v712
        %v714 = vpop.f32.mrf.mxu0
        %v715 = vadd.f32 0.0, %v714
        %716 = vmatprep.mubr.bf16.mxu0 0
        %717 = vmatmul.mubr.bf16.gmra.mxu0 %v547
        %v718 = vpop.f32.mrf.mxu0
        %v719 = vadd.f32 0.0, %v718
        %v720 = vpop.f32.mrf.mxu0
        %v721 = vadd.f32 0.0, %v720
        %v722 = vpop.f32.mrf.mxu0
        %v723 = vadd.f32 0.0, %v722
        %v724 = vpop.f32.mrf.mxu0
        %v725 = vadd.f32 0.0, %v724
        %726 = vmatprep.mubr.bf16.mxu0 0
        %727 = vmatmul.mubr.bf16.gmra.mxu0 %v550
        %v728 = vpop.f32.mrf.mxu0
        %v729 = vadd.f32 0.0, %v728
        %v730 = vpop.f32.mrf.mxu0
        %v731 = vadd.f32 0.0, %v730
        %v732 = vpop.f32.mrf.mxu0
        %v733 = vadd.f32 0.0, %v732
        %v734 = vpop.f32.mrf.mxu0
        %v735 = vadd.f32 0.0, %v734
        %736 = vmatprep.mubr.bf16.mxu0 0
        %737 = vmatmul.mubr.bf16.gmra.mxu0 %v553
        %v738 = vpop.f32.mrf.mxu0
        %v739 = vadd.f32 0.0, %v738
        %v740 = vpop.f32.mrf.mxu0
        %v741 = vadd.f32 0.0, %v740
        %v742 = vpop.f32.mrf.mxu0
        %v743 = vadd.f32 0.0, %v742
        %v744 = vpop.f32.mrf.mxu0
        %v745 = vadd.f32 0.0, %v744
        %746 = vmatprep.mubr.bf16.mxu0 0
        %747 = vmatmul.mubr.bf16.gmra.mxu0 %v556
        %v748 = vpop.f32.mrf.mxu0
        %v749 = vadd.f32 0.0, %v748
        %v750 = vpop.f32.mrf.mxu0
        %v751 = vadd.f32 0.0, %v750
        %v752 = vpop.f32.mrf.mxu0
        %v753 = vadd.f32 0.0, %v752
        %v754 = vpop.f32.mrf.mxu0
        %v755 = vadd.f32 0.0, %v754
        %756 = vmatprep.mubr.bf16.mxu0 0
        %757 = vmatmul.mubr.bf16.gmra.mxu0 %v559
        %v758 = vpop.f32.mrf.mxu0
        %v759 = vadd.f32 0.0, %v758
        %v760 = vpop.f32.mrf.mxu0
        %v761 = vadd.f32 0.0, %v760
        %v762 = vpop.f32.mrf.mxu0
        %v763 = vadd.f32 0.0, %v762
        %v764 = vpop.f32.mrf.mxu0
        %v765 = vadd.f32 0.0, %v764
        %766 = vmatprep.mubr.bf16.mxu0 0
        %767 = vmatmul.mubr.bf16.gmra.mxu0 %v562
        %v768 = vpop.f32.mrf.mxu0
        %v769 = vadd.f32 0.0, %v768
        %v770 = vpop.f32.mrf.mxu0
        %v771 = vadd.f32 0.0, %v770
        %v772 = vpop.f32.mrf.mxu0
        %v773 = vadd.f32 0.0, %v772
        %v774 = vpop.f32.mrf.mxu0
        %v775 = vadd.f32 0.0, %v774
        %776 = vmatprep.mubr.bf16.mxu0 0
        %777 = vmatmul.mubr.bf16.gmra.mxu0 %v565
        %v778 = vpop.f32.mrf.mxu0
        %v779 = vadd.f32 0.0, %v778
        %v780 = vpop.f32.mrf.mxu0
        %v781 = vadd.f32 0.0, %v780
        %v782 = vpop.f32.mrf.mxu0
        %v783 = vadd.f32 0.0, %v782
        %v784 = vpop.f32.mrf.mxu0
        %v785 = vadd.f32 0.0, %v784
        %786 = vmatprep.mubr.bf16.mxu0 0
        %787 = vmatmul.mubr.bf16.gmra.mxu0 %v568
        %v788 = vpop.f32.mrf.mxu0
        %v789 = vadd.f32 0.0, %v788
        %v790 = vpop.f32.mrf.mxu0
        %v791 = vadd.f32 0.0, %v790
        %v792 = vpop.f32.mrf.mxu0
        %v793 = vadd.f32 0.0, %v792
        %v794 = vpop.f32.mrf.mxu0
        %v795 = vadd.f32 0.0, %v794
        %796 = vmatprep.mubr.bf16.mxu0 0
        %797 = vmatmul.mubr.bf16.gmra.mxu0 %v571
        %v798 = vpop.f32.mrf.mxu0
        %v799 = vadd.f32 0.0, %v798
        %v800 = vpop.f32.mrf.mxu0
        %v801 = vadd.f32 0.0, %v800
        %v802 = vpop.f32.mrf.mxu0
        %v803 = vadd.f32 0.0, %v802
        %v804 = vpop.f32.mrf.mxu0
        %v805 = vadd.f32 0.0, %v804
        %806 = vmatprep.mubr.bf16.mxu0 0
        %807 = vmatmul.mubr.bf16.gmra.mxu0 %v574
        %v808 = vpop.f32.mrf.mxu0
        %v809 = vadd.f32 0.0, %v808
        %v810 = vpop.f32.mrf.mxu0
        %v811 = vadd.f32 0.0, %v810
        %v812 = vpop.f32.mrf.mxu0
        %v813 = vadd.f32 0.0, %v812
        %v814 = vpop.f32.mrf.mxu0
        %v815 = vadd.f32 0.0, %v814
        %816 = vmatprep.mubr.bf16.mxu0 0
        %817 = vmatmul.mubr.bf16.gmra.mxu0 %v577
        %v818 = vpop.f32.mrf.mxu0
        %v819 = vadd.f32 0.0, %v818
        %v820 = vpop.f32.mrf.mxu0
        %v821 = vadd.f32 0.0, %v820
        %v822 = vpop.f32.mrf.mxu0
        %v823 = vadd.f32 0.0, %v822
        %v824 = vpop.f32.mrf.mxu0
        %v825 = vadd.f32 0.0, %v824
        %826 = vmatprep.mubr.bf16.mxu0 0
        %827 = vmatmul.mubr.bf16.gmra.mxu0 %v580
        %v828 = vpop.f32.mrf.mxu0
        %v829 = vadd.f32 0.0, %v828
        %v830 = vpop.f32.mrf.mxu0
        %v831 = vadd.f32 0.0, %v830
        %v832 = vpop.f32.mrf.mxu0
        %v833 = vadd.f32 0.0, %v832
        %v834 = vpop.f32.mrf.mxu0
        %v835 = vadd.f32 0.0, %v834
        %836 = vmatprep.mubr.bf16.mxu0 0
        %837 = vmatmul.mubr.bf16.gmra.mxu0 %v583
        %v838 = vpop.f32.mrf.mxu0
        %v839 = vadd.f32 0.0, %v838
        %v840 = vpop.f32.mrf.mxu0
        %v841 = vadd.f32 0.0, %v840
        %v842 = vpop.f32.mrf.mxu0
        %v843 = vadd.f32 0.0, %v842
        %v844 = vpop.f32.mrf.mxu0
        %v845 = vadd.f32 0.0, %v844
        %846 = vmatprep.mubr.bf16.mxu0 0
        %847 = vmatmul.mubr.bf16.gmra.mxu0 %v586
        %v848 = vpop.f32.mrf.mxu0
        %v849 = vadd.f32 0.0, %v848
        %v850 = vpop.f32.mrf.mxu0
        %v851 = vadd.f32 0.0, %v850
        %v852 = vpop.f32.mrf.mxu0
        %v853 = vadd.f32 0.0, %v852
        %v854 = vpop.f32.mrf.mxu0
        %v855 = vadd.f32 0.0, %v854
        %856 = vmatprep.mubr.bf16.mxu0 0
        %857 = vmatmul.mubr.bf16.gmra.mxu0 %v589
        %v858 = vpop.f32.mrf.mxu0
        %v859 = vadd.f32 0.0, %v858
        %v860 = vpop.f32.mrf.mxu0
        %v861 = vadd.f32 0.0, %v860
        %v862 = vpop.f32.mrf.mxu0
        %v863 = vadd.f32 0.0, %v862
        %v864 = vpop.f32.mrf.mxu0
        %v865 = vadd.f32 0.0, %v864
        %866 = vmatprep.mubr.bf16.mxu0 0
        %867 = vmatmul.mubr.bf16.gmra.mxu0 %v592
        %v868 = vpop.f32.mrf.mxu0
        %v869 = vadd.f32 0.0, %v868
        %v870 = vpop.f32.mrf.mxu0
        %v871 = vadd.f32 0.0, %v870
        %v872 = vpop.f32.mrf.mxu0
        %v873 = vadd.f32 0.0, %v872
        %v874 = vpop.f32.mrf.mxu0
        %v875 = vadd.f32 0.0, %v874
        %876 = vmatprep.mubr.bf16.mxu0 0
        %877 = vmatmul.mubr.bf16.gmra.mxu0 %v595
        %v878 = vpop.f32.mrf.mxu0
        %v879 = vadd.f32 0.0, %v878
        %v880 = vpop.f32.mrf.mxu0
        %v881 = vadd.f32 0.0, %v880
        %v882 = vpop.f32.mrf.mxu0
        %v883 = vadd.f32 0.0, %v882
        %v884 = vpop.f32.mrf.mxu0
        %v885 = vadd.f32 0.0, %v884
        %886 = vmatprep.mubr.bf16.mxu0 0
        %887 = vmatmul.mubr.bf16.gmra.mxu0 %v598
        %v888 = vpop.f32.mrf.mxu0
        %v889 = vadd.f32 0.0, %v888
        %v890 = vpop.f32.mrf.mxu0
        %v891 = vadd.f32 0.0, %v890
        %v892 = vpop.f32.mrf.mxu0
        %v893 = vadd.f32 0.0, %v892
        %v894 = vpop.f32.mrf.mxu0
        %v895 = vadd.f32 0.0, %v894
        %896 = vmatprep.mubr.bf16.mxu0 0
        %897 = vmatmul.mubr.bf16.gmra.mxu0 %v601
        %v898 = vpop.f32.mrf.mxu0
        %v899 = vadd.f32 0.0, %v898
        %v900 = vpop.f32.mrf.mxu0
        %v901 = vadd.f32 0.0, %v900
        %v902 = vpop.f32.mrf.mxu0
        %v903 = vadd.f32 0.0, %v902
        %v904 = vpop.f32.mrf.mxu0
        %v905 = vadd.f32 0.0, %v904
        %906 = vmatprep.mubr.bf16.mxu0 0
        %907 = vmatmul.mubr.bf16.gmra.mxu0 %v604
        %v908 = vpop.f32.mrf.mxu0
        %v909 = vadd.f32 0.0, %v908
        %v910 = vpop.f32.mrf.mxu0
        %v911 = vadd.f32 0.0, %v910
        %v912 = vpop.f32.mrf.mxu0
        %v913 = vadd.f32 0.0, %v912
        %v914 = vpop.f32.mrf.mxu0
        %v915 = vadd.f32 0.0, %v914
        %916 = vmatprep.mubr.bf16.mxu0 0
        %917 = vmatmul.mubr.bf16.gmra.mxu0 %v607
        %v918 = vpop.f32.mrf.mxu0
        %v919 = vadd.f32 0.0, %v918
        %v920 = vpop.f32.mrf.mxu0
        %v921 = vadd.f32 0.0, %v920
        %v922 = vpop.f32.mrf.mxu0
        %v923 = vadd.f32 0.0, %v922
        %v924 = vpop.f32.mrf.mxu0
        %v925 = vadd.f32 0.0, %v924
        %926 = vmatprep.mubr.bf16.mxu0 0
        %927 = vmatmul.mubr.bf16.gmra.mxu0 %v610
        %v928 = vpop.f32.mrf.mxu0
        %v929 = vadd.f32 0.0, %v928
        %v930 = vpop.f32.mrf.mxu0
        %v931 = vadd.f32 0.0, %v930
        %v932 = vpop.f32.mrf.mxu0
        %v933 = vadd.f32 0.0, %v932
        %v934 = vpop.f32.mrf.mxu0
        %v935 = vadd.f32 0.0, %v934
        %936 = vmatprep.mubr.bf16.mxu0 0
        %937 = vmatmul.mubr.bf16.gmra.mxu0 %v613
        %v938 = vpop.f32.mrf.mxu0
        %v939 = vadd.f32 0.0, %v938
        %v940 = vpop.f32.mrf.mxu0
        %v941 = vadd.f32 0.0, %v940
        %v942 = vpop.f32.mrf.mxu0
        %v943 = vadd.f32 0.0, %v942
        %v944 = vpop.f32.mrf.mxu0
        %v945 = vadd.f32 0.0, %v944
        %946 = vmatprep.mubr.bf16.mxu0 0
        %947 = vmatmul.mubr.bf16.gmra.mxu0 %v616
        %v948 = vpop.f32.mrf.mxu0
        %v949 = vadd.f32 0.0, %v948
        %v950 = vpop.f32.mrf.mxu0
        %v951 = vadd.f32 0.0, %v950
        %v952 = vpop.f32.mrf.mxu0
        %v953 = vadd.f32 0.0, %v952
        %v954 = vpop.f32.mrf.mxu0
        %v955 = vadd.f32 0.0, %v954
        %956 = vmatprep.mubr.bf16.mxu0 0
        %957 = vmatmul.mubr.bf16.gmra.mxu0 %v619
        %v958 = vpop.f32.mrf.mxu0
        %v959 = vadd.f32 0.0, %v958
        %v960 = vpop.f32.mrf.mxu0
        %v961 = vadd.f32 0.0, %v960
        %v962 = vpop.f32.mrf.mxu0
        %v963 = vadd.f32 0.0, %v962
        %v964 = vpop.f32.mrf.mxu0
        %v965 = vadd.f32 0.0, %v964
        %966 = vmatprep.mubr.bf16.mxu0 0
        %967 = vmatmul.mubr.bf16.gmra.mxu0 %v622
        %v968 = vpop.f32.mrf.mxu0
        %v969 = vadd.f32 0.0, %v968
        %v970 = vpop.f32.mrf.mxu0
        %v971 = vadd.f32 0.0, %v970
        %v972 = vpop.f32.mrf.mxu0
        %v973 = vadd.f32 0.0, %v972
        %v974 = vpop.f32.mrf.mxu0
        %v975 = vadd.f32 0.0, %v974
        %976 = vmatprep.mubr.bf16.mxu0 0
        %977 = vmatmul.mubr.bf16.gmra.mxu0 %v625
        %v978 = vpop.f32.mrf.mxu0
        %v979 = vadd.f32 0.0, %v978
        %v980 = vpop.f32.mrf.mxu0
        %v981 = vadd.f32 0.0, %v980
        %v982 = vpop.f32.mrf.mxu0
        %v983 = vadd.f32 0.0, %v982
        %v984 = vpop.f32.mrf.mxu0
        %v985 = vadd.f32 0.0, %v984
        %986 = vdwg.mxu0
        %v987 = vmax.f32 %v669, %v679
        %v988 = vmax.f32 %v673, %v683
        %v989 = vmax.f32 %v987, %v689
        %v990 = vmax.f32 %v988, %v693
        %v991 = vmax.f32 %v989, %v699
        %v992 = vmax.f32 %v990, %v703
        %v993 = vmax.f32 %v991, %v709
        %v994 = vmax.f32 %v992, %v713
        %v995 = vmax.f32 %v993, %v719
        %v996 = vmax.f32 %v994, %v723
        %v997 = vmax.f32 %v995, %v729
        %v998 = vmax.f32 %v996, %v733
        %v999 = vmax.f32 %v997, %v739
        %v1000 = vmax.f32 %v998, %v743
        %v1001 = vmax.f32 %v999, %v749
        %v1002 = vmax.f32 %v1000, %v753
        %v1003 = vmax.f32 %v1001, %v759
        %v1004 = vmax.f32 %v1002, %v763
        %v1005 = vmax.f32 %v1003, %v769
        %v1006 = vmax.f32 %v1004, %v773
        %v1007 = vmax.f32 %v1005, %v779
        %v1008 = vmax.f32 %v1006, %v783
        %v1009 = vmax.f32 %v1007, %v789
        %v1010 = vmax.f32 %v1008, %v793
        %v1011 = vmax.f32 %v1009, %v799
        %v1012 = vmax.f32 %v1010, %v803
        %v1013 = vmax.f32 %v1011, %v809
        %v1014 = vmax.f32 %v1012, %v813
        %v1015 = vmax.f32 %v1013, %v819
        %v1016 = vmax.f32 %v1014, %v823
        %v1017 = vmax.f32 %v1015, %v829
        %v1018 = vmax.f32 %v1016, %v833
        %v1019 = vmax.f32 %v1017, %v839
        %v1020 = vmax.f32 %v1018, %v843
        %v1021 = vmax.f32 %v1019, %v849
        %v1022 = vmax.f32 %v1020, %v853
        %v1023 = vmax.f32 %v1021, %v859
        %v1024 = vmax.f32 %v1022, %v863
        %v1025 = vmax.f32 %v1023, %v869
        %v1026 = vmax.f32 %v1024, %v873
        %v1027 = vmax.f32 %v1025, %v879
        %v1028 = vmax.f32 %v1026, %v883
        %v1029 = vmax.f32 %v1027, %v889
        %v1030 = vmax.f32 %v1028, %v893
        %v1031 = vmax.f32 %v1029, %v899
        %v1032 = vmax.f32 %v1030, %v903
        %v1033 = vmax.f32 %v1031, %v909
        %v1034 = vmax.f32 %v1032, %v913
        %v1035 = vmax.f32 %v1033, %v919
        %v1036 = vmax.f32 %v1034, %v923
        %v1037 = vmax.f32 %v1035, %v929
        %v1038 = vmax.f32 %v1036, %v933
        %v1039 = vmax.f32 %v1037, %v939
        %v1040 = vmax.f32 %v1038, %v943
        %v1041 = vmax.f32 %v1039, %v949
        %v1042 = vmax.f32 %v1040, %v953
        %v1043 = vmax.f32 %v1041, %v959
        %v1044 = vmax.f32 %v1042, %v963
        %v1045 = vmax.f32 %v1043, %v969
        %v1046 = vmax.f32 %v1044, %v973
        %v1047 = vmax.f32 %v1045, %v979
        %v1048 = vmax.f32 %v1046, %v983
        %v1049 = vmax.f32 %v1047, %v1048
        %v1050 = vrot.slane %v1049, 4
        %v1051 = vmax.f32 %v1049, %v1050
        %v1052 = vrot.slane %v1051, 2
        %v1053 = vmax.f32 %v1051, %v1052
        %v1054 = vrot.slane %v1053, 1
        %v1055 = vmax.f32 %v1053, %v1054
        %v1056 = vmax.f32 %v671, %v681
        %v1057 = vmax.f32 %v675, %v685
        %v1058 = vmax.f32 %v1056, %v691
        %v1059 = vmax.f32 %v1057, %v695
        %v1060 = vmax.f32 %v1058, %v701
        %v1061 = vmax.f32 %v1059, %v705
        %v1062 = vmax.f32 %v1060, %v711
        %v1063 = vmax.f32 %v1061, %v715
        %v1064 = vmax.f32 %v1062, %v721
        %v1065 = vmax.f32 %v1063, %v725
        %v1066 = vmax.f32 %v1064, %v731
        %v1067 = vmax.f32 %v1065, %v735
        %v1068 = vmax.f32 %v1066, %v741
        %v1069 = vmax.f32 %v1067, %v745
        %v1070 = vmax.f32 %v1068, %v751
        %v1071 = vmax.f32 %v1069, %v755
        %v1072 = vmax.f32 %v1070, %v761
        %v1073 = vmax.f32 %v1071, %v765
        %v1074 = vmax.f32 %v1072, %v771
        %v1075 = vmax.f32 %v1073, %v775
        %v1076 = vmax.f32 %v1074, %v781
        %v1077 = vmax.f32 %v1075, %v785
        %v1078 = vmax.f32 %v1076, %v791
        %v1079 = vmax.f32 %v1077, %v795
        %v1080 = vmax.f32 %v1078, %v801
        %v1081 = vmax.f32 %v1079, %v805
        %v1082 = vmax.f32 %v1080, %v811
        %v1083 = vmax.f32 %v1081, %v815
        %v1084 = vmax.f32 %v1082, %v821
        %v1085 = vmax.f32 %v1083, %v825
        %v1086 = vmax.f32 %v1084, %v831
        %v1087 = vmax.f32 %v1085, %v835
        %v1088 = vmax.f32 %v1086, %v841
        %v1089 = vmax.f32 %v1087, %v845
        %v1090 = vmax.f32 %v1088, %v851
        %v1091 = vmax.f32 %v1089, %v855
        %v1092 = vmax.f32 %v1090, %v861
        %v1093 = vmax.f32 %v1091, %v865
        %v1094 = vmax.f32 %v1092, %v871
        %v1095 = vmax.f32 %v1093, %v875
        %v1096 = vmax.f32 %v1094, %v881
        %v1097 = vmax.f32 %v1095, %v885
        %v1098 = vmax.f32 %v1096, %v891
        %v1099 = vmax.f32 %v1097, %v895
        %v1100 = vmax.f32 %v1098, %v901
        %v1101 = vmax.f32 %v1099, %v905
        %v1102 = vmax.f32 %v1100, %v911
        %v1103 = vmax.f32 %v1101, %v915
        %v1104 = vmax.f32 %v1102, %v921
        %v1105 = vmax.f32 %v1103, %v925
        %v1106 = vmax.f32 %v1104, %v931
        %v1107 = vmax.f32 %v1105, %v935
        %v1108 = vmax.f32 %v1106, %v941
        %v1109 = vmax.f32 %v1107, %v945
        %v1110 = vmax.f32 %v1108, %v951
        %v1111 = vmax.f32 %v1109, %v955
        %v1112 = vmax.f32 %v1110, %v961
        %v1113 = vmax.f32 %v1111, %v965
        %v1114 = vmax.f32 %v1112, %v971
        %v1115 = vmax.f32 %v1113, %v975
        %v1116 = vmax.f32 %v1114, %v981
        %v1117 = vmax.f32 %v1115, %v985
        %v1118 = vmax.f32 %v1116, %v1117
        %v1119 = vrot.slane %v1118, 4
        %v1120 = vmax.f32 %v1118, %v1119
        %v1121 = vrot.slane %v1120, 2
        %v1122 = vmax.f32 %v1120, %v1121
        %v1123 = vrot.slane %v1122, 1
        %v1124 = vmax.f32 %v1122, %v1123
        %v1125 = vsub.f32 %v669, %v1055
        %v1126 = vsub.f32 %v671, %v1124
        %v1127 = vsub.f32 %v673, %v1055
        %v1128 = vsub.f32 %v675, %v1124
        %v1129 = vsub.f32 %v679, %v1055
        %v1130 = vsub.f32 %v681, %v1124
        %v1131 = vsub.f32 %v683, %v1055
        %v1132 = vsub.f32 %v685, %v1124
        %v1133 = vsub.f32 %v689, %v1055
        %v1134 = vsub.f32 %v691, %v1124
        %v1135 = vsub.f32 %v693, %v1055
        %v1136 = vsub.f32 %v695, %v1124
        %v1137 = vsub.f32 %v699, %v1055
        %v1138 = vsub.f32 %v701, %v1124
        %v1139 = vsub.f32 %v703, %v1055
        %v1140 = vsub.f32 %v705, %v1124
        %v1141 = vsub.f32 %v709, %v1055
        %v1142 = vsub.f32 %v711, %v1124
        %v1143 = vsub.f32 %v713, %v1055
        %v1144 = vsub.f32 %v715, %v1124
        %v1145 = vsub.f32 %v719, %v1055
        %v1146 = vsub.f32 %v721, %v1124
        %v1147 = vsub.f32 %v723, %v1055
        %v1148 = vsub.f32 %v725, %v1124
        %v1149 = vsub.f32 %v729, %v1055
        %v1150 = vsub.f32 %v731, %v1124
        %v1151 = vsub.f32 %v733, %v1055
        %v1152 = vsub.f32 %v735, %v1124
        %v1153 = vsub.f32 %v739, %v1055
        %v1154 = vsub.f32 %v741, %v1124
        %v1155 = vsub.f32 %v743, %v1055
        %v1156 = vsub.f32 %v745, %v1124
        %v1157 = vsub.f32 %v749, %v1055
        %v1158 = vsub.f32 %v751, %v1124
        %v1159 = vsub.f32 %v753, %v1055
        %v1160 = vsub.f32 %v755, %v1124
        %v1161 = vsub.f32 %v759, %v1055
        %v1162 = vsub.f32 %v761, %v1124
        %v1163 = vsub.f32 %v763, %v1055
        %v1164 = vsub.f32 %v765, %v1124
        %v1165 = vsub.f32 %v769, %v1055
        %v1166 = vsub.f32 %v771, %v1124
        %v1167 = vsub.f32 %v773, %v1055
        %v1168 = vsub.f32 %v775, %v1124
        %v1169 = vsub.f32 %v779, %v1055
        %v1170 = vsub.f32 %v781, %v1124
        %v1171 = vsub.f32 %v783, %v1055
        %v1172 = vsub.f32 %v785, %v1124
        %v1173 = vsub.f32 %v789, %v1055
        %v1174 = vsub.f32 %v791, %v1124
        %v1175 = vsub.f32 %v793, %v1055
        %v1176 = vsub.f32 %v795, %v1124
        %v1177 = vsub.f32 %v799, %v1055
        %v1178 = vsub.f32 %v801, %v1124
        %v1179 = vsub.f32 %v803, %v1055
        %v1180 = vsub.f32 %v805, %v1124
        %v1181 = vsub.f32 %v809, %v1055
        %v1182 = vsub.f32 %v811, %v1124
        %v1183 = vsub.f32 %v813, %v1055
        %v1184 = vsub.f32 %v815, %v1124
        %v1185 = vsub.f32 %v819, %v1055
        %v1186 = vsub.f32 %v821, %v1124
        %v1187 = vsub.f32 %v823, %v1055
        %v1188 = vsub.f32 %v825, %v1124
        %v1189 = vsub.f32 %v829, %v1055
        %v1190 = vsub.f32 %v831, %v1124
        %v1191 = vsub.f32 %v833, %v1055
        %v1192 = vsub.f32 %v835, %v1124
        %v1193 = vsub.f32 %v839, %v1055
        %v1194 = vsub.f32 %v841, %v1124
        %v1195 = vsub.f32 %v843, %v1055
        %v1196 = vsub.f32 %v845, %v1124
        %v1197 = vsub.f32 %v849, %v1055
        %v1198 = vsub.f32 %v851, %v1124
        %v1199 = vsub.f32 %v853, %v1055
        %v1200 = vsub.f32 %v855, %v1124
        %v1201 = vsub.f32 %v859, %v1055
        %v1202 = vsub.f32 %v861, %v1124
        %v1203 = vsub.f32 %v863, %v1055
        %v1204 = vsub.f32 %v865, %v1124
        %v1205 = vsub.f32 %v869, %v1055
        %v1206 = vsub.f32 %v871, %v1124
        %v1207 = vsub.f32 %v873, %v1055
        %v1208 = vsub.f32 %v875, %v1124
        %v1209 = vsub.f32 %v879, %v1055
        %v1210 = vsub.f32 %v881, %v1124
        %v1211 = vsub.f32 %v883, %v1055
        %v1212 = vsub.f32 %v885, %v1124
        %v1213 = vsub.f32 %v889, %v1055
        %v1214 = vsub.f32 %v891, %v1124
        %v1215 = vsub.f32 %v893, %v1055
        %v1216 = vsub.f32 %v895, %v1124
        %v1217 = vsub.f32 %v899, %v1055
        %v1218 = vsub.f32 %v901, %v1124
        %v1219 = vsub.f32 %v903, %v1055
        %v1220 = vsub.f32 %v905, %v1124
        %v1221 = vsub.f32 %v909, %v1055
        %v1222 = vsub.f32 %v911, %v1124
        %v1223 = vsub.f32 %v913, %v1055
        %v1224 = vsub.f32 %v915, %v1124
        %v1225 = vsub.f32 %v919, %v1055
        %v1226 = vsub.f32 %v921, %v1124
        %v1227 = vsub.f32 %v923, %v1055
        %v1228 = vsub.f32 %v925, %v1124
        %v1229 = vsub.f32 %v929, %v1055
        %v1230 = vsub.f32 %v931, %v1124
        %v1231 = vsub.f32 %v933, %v1055
        %v1232 = vsub.f32 %v935, %v1124
        %v1233 = vsub.f32 %v939, %v1055
        %v1234 = vsub.f32 %v941, %v1124
        %v1235 = vsub.f32 %v943, %v1055
        %v1236 = vsub.f32 %v945, %v1124
        %v1237 = vsub.f32 %v949, %v1055
        %v1238 = vsub.f32 %v951, %v1124
        %v1239 = vsub.f32 %v953, %v1055
        %v1240 = vsub.f32 %v955, %v1124
        %v1241 = vsub.f32 %v959, %v1055
        %v1242 = vsub.f32 %v961, %v1124
        %v1243 = vsub.f32 %v963, %v1055
        %v1244 = vsub.f32 %v965, %v1124
        %v1245 = vsub.f32 %v969, %v1055
        %v1246 = vsub.f32 %v971, %v1124
        %v1247 = vsub.f32 %v973, %v1055
        %v1248 = vsub.f32 %v975, %v1124
        %v1249 = vsub.f32 %v979, %v1055
        %v1250 = vsub.f32 %v981, %v1124
        %v1251 = vsub.f32 %v983, %v1055
        %v1252 = vsub.f32 %v985, %v1124
        %v1253 = vmul.f32 %v1125, 1.442695
        %v1254 = vpow.pop %v1253
        %v1255 = vmul.f32 %v1126, 1.442695
        %v1256 = vpow.pop %v1255
        %v1257 = vmul.f32 %v1127, 1.442695
        %v1258 = vpow.pop %v1257
        %v1259 = vmul.f32 %v1128, 1.442695
        %v1260 = vpow.pop %v1259
        %v1261 = vmul.f32 %v1129, 1.442695
        %v1262 = vpow.pop %v1261
        %v1263 = vmul.f32 %v1130, 1.442695
        %v1264 = vpow.pop %v1263
        %v1265 = vmul.f32 %v1131, 1.442695
        %v1266 = vpow.pop %v1265
        %v1267 = vmul.f32 %v1132, 1.442695
        %v1268 = vpow.pop %v1267
        %v1269 = vmul.f32 %v1133, 1.442695
        %v1270 = vpow.pop %v1269
        %v1271 = vmul.f32 %v1134, 1.442695
        %v1272 = vpow.pop %v1271
        %v1273 = vmul.f32 %v1135, 1.442695
        %v1274 = vpow.pop %v1273
        %v1275 = vmul.f32 %v1136, 1.442695
        %v1276 = vpow.pop %v1275
        %v1277 = vmul.f32 %v1137, 1.442695
        %v1278 = vpow.pop %v1277
        %v1279 = vmul.f32 %v1138, 1.442695
        %v1280 = vpow.pop %v1279
        %v1281 = vmul.f32 %v1139, 1.442695
        %v1282 = vpow.pop %v1281
        %v1283 = vmul.f32 %v1140, 1.442695
        %v1284 = vpow.pop %v1283
        %v1285 = vmul.f32 %v1141, 1.442695
        %v1286 = vpow.pop %v1285
        %v1287 = vmul.f32 %v1142, 1.442695
        %v1288 = vpow.pop %v1287
        %v1289 = vmul.f32 %v1143, 1.442695
        %v1290 = vpow.pop %v1289
        %v1291 = vmul.f32 %v1144, 1.442695
        %v1292 = vpow.pop %v1291
        %v1293 = vmul.f32 %v1145, 1.442695
        %v1294 = vpow.pop %v1293
        %v1295 = vmul.f32 %v1146, 1.442695
        %v1296 = vpow.pop %v1295
        %v1297 = vmul.f32 %v1147, 1.442695
        %v1298 = vpow.pop %v1297
        %v1299 = vmul.f32 %v1148, 1.442695
        %v1300 = vpow.pop %v1299
        %v1301 = vmul.f32 %v1149, 1.442695
        %v1302 = vpow.pop %v1301
        %v1303 = vmul.f32 %v1150, 1.442695
        %v1304 = vpow.pop %v1303
        %v1305 = vmul.f32 %v1151, 1.442695
        %v1306 = vpow.pop %v1305
        %v1307 = vmul.f32 %v1152, 1.442695
        %v1308 = vpow.pop %v1307
        %v1309 = vmul.f32 %v1153, 1.442695
        %v1310 = vpow.pop %v1309
        %v1311 = vmul.f32 %v1154, 1.442695
        %v1312 = vpow.pop %v1311
        %v1313 = vmul.f32 %v1155, 1.442695
        %v1314 = vpow.pop %v1313
        %v1315 = vmul.f32 %v1156, 1.442695
        %v1316 = vpow.pop %v1315
        %v1317 = vmul.f32 %v1157, 1.442695
        %v1318 = vpow.pop %v1317
        %v1319 = vmul.f32 %v1158, 1.442695
        %v1320 = vpow.pop %v1319
        %v1321 = vmul.f32 %v1159, 1.442695
        %v1322 = vpow.pop %v1321
        %v1323 = vmul.f32 %v1160, 1.442695
        %v1324 = vpow.pop %v1323
        %v1325 = vmul.f32 %v1161, 1.442695
        %v1326 = vpow.pop %v1325
        %v1327 = vmul.f32 %v1162, 1.442695
        %v1328 = vpow.pop %v1327
        %v1329 = vmul.f32 %v1163, 1.442695
        %v1330 = vpow.pop %v1329
        %v1331 = vmul.f32 %v1164, 1.442695
        %v1332 = vpow.pop %v1331
        %v1333 = vmul.f32 %v1165, 1.442695
        %v1334 = vpow.pop %v1333
        %v1335 = vmul.f32 %v1166, 1.442695
        %v1336 = vpow.pop %v1335
        %v1337 = vmul.f32 %v1167, 1.442695
        %v1338 = vpow.pop %v1337
        %v1339 = vmul.f32 %v1168, 1.442695
        %v1340 = vpow.pop %v1339
        %v1341 = vmul.f32 %v1169, 1.442695
        %v1342 = vpow.pop %v1341
        %v1343 = vmul.f32 %v1170, 1.442695
        %v1344 = vpow.pop %v1343
        %v1345 = vmul.f32 %v1171, 1.442695
        %v1346 = vpow.pop %v1345
        %v1347 = vmul.f32 %v1172, 1.442695
        %v1348 = vpow.pop %v1347
        %v1349 = vmul.f32 %v1173, 1.442695
        %v1350 = vpow.pop %v1349
        %v1351 = vmul.f32 %v1174, 1.442695
        %v1352 = vpow.pop %v1351
        %v1353 = vmul.f32 %v1175, 1.442695
        %v1354 = vpow.pop %v1353
        %v1355 = vmul.f32 %v1176, 1.442695
        %v1356 = vpow.pop %v1355
        %v1357 = vmul.f32 %v1177, 1.442695
        %v1358 = vpow.pop %v1357
        %v1359 = vmul.f32 %v1178, 1.442695
        %v1360 = vpow.pop %v1359
        %v1361 = vmul.f32 %v1179, 1.442695
        %v1362 = vpow.pop %v1361
        %v1363 = vmul.f32 %v1180, 1.442695
        %v1364 = vpow.pop %v1363
        %v1365 = vmul.f32 %v1181, 1.442695
        %v1366 = vpow.pop %v1365
        %v1367 = vmul.f32 %v1182, 1.442695
        %v1368 = vpow.pop %v1367
        %v1369 = vmul.f32 %v1183, 1.442695
        %v1370 = vpow.pop %v1369
        %v1371 = vmul.f32 %v1184, 1.442695
        %v1372 = vpow.pop %v1371
        %v1373 = vmul.f32 %v1185, 1.442695
        %v1374 = vpow.pop %v1373
        %v1375 = vmul.f32 %v1186, 1.442695
        %v1376 = vpow.pop %v1375
        %v1377 = vmul.f32 %v1187, 1.442695
        %v1378 = vpow.pop %v1377
        %v1379 = vmul.f32 %v1188, 1.442695
        %v1380 = vpow.pop %v1379
        %v1381 = vmul.f32 %v1189, 1.442695
        %v1382 = vpow.pop %v1381
        %v1383 = vmul.f32 %v1190, 1.442695
        %v1384 = vpow.pop %v1383
        %v1385 = vmul.f32 %v1191, 1.442695
        %v1386 = vpow.pop %v1385
        %v1387 = vmul.f32 %v1192, 1.442695
        %v1388 = vpow.pop %v1387
        %v1389 = vmul.f32 %v1193, 1.442695
        %v1390 = vpow.pop %v1389
        %v1391 = vmul.f32 %v1194, 1.442695
        %v1392 = vpow.pop %v1391
        %v1393 = vmul.f32 %v1195, 1.442695
        %v1394 = vpow.pop %v1393
        %v1395 = vmul.f32 %v1196, 1.442695
        %v1396 = vpow.pop %v1395
        %v1397 = vmul.f32 %v1197, 1.442695
        %v1398 = vpow.pop %v1397
        %v1399 = vmul.f32 %v1198, 1.442695
        %v1400 = vpow.pop %v1399
        %v1401 = vmul.f32 %v1199, 1.442695
        %v1402 = vpow.pop %v1401
        %v1403 = vmul.f32 %v1200, 1.442695
        %v1404 = vpow.pop %v1403
        %v1405 = vmul.f32 %v1201, 1.442695
        %v1406 = vpow.pop %v1405
        %v1407 = vmul.f32 %v1202, 1.442695
        %v1408 = vpow.pop %v1407
        %v1409 = vmul.f32 %v1203, 1.442695
        %v1410 = vpow.pop %v1409
        %v1411 = vmul.f32 %v1204, 1.442695
        %v1412 = vpow.pop %v1411
        %v1413 = vmul.f32 %v1205, 1.442695
        %v1414 = vpow.pop %v1413
        %v1415 = vmul.f32 %v1206, 1.442695
        %v1416 = vpow.pop %v1415
        %v1417 = vmul.f32 %v1207, 1.442695
        %v1418 = vpow.pop %v1417
        %v1419 = vmul.f32 %v1208, 1.442695
        %v1420 = vpow.pop %v1419
        %v1421 = vmul.f32 %v1209, 1.442695
        %v1422 = vpow.pop %v1421
        %v1423 = vmul.f32 %v1210, 1.442695
        %v1424 = vpow.pop %v1423
        %v1425 = vmul.f32 %v1211, 1.442695
        %v1426 = vpow.pop %v1425
        %v1427 = vmul.f32 %v1212, 1.442695
        %v1428 = vpow.pop %v1427
        %v1429 = vmul.f32 %v1213, 1.442695
        %v1430 = vpow.pop %v1429
        %v1431 = vmul.f32 %v1214, 1.442695
        %v1432 = vpow.pop %v1431
        %v1433 = vmul.f32 %v1215, 1.442695
        %v1434 = vpow.pop %v1433
        %v1435 = vmul.f32 %v1216, 1.442695
        %v1436 = vpow.pop %v1435
        %v1437 = vmul.f32 %v1217, 1.442695
        %v1438 = vpow.pop %v1437
        %v1439 = vmul.f32 %v1218, 1.442695
        %v1440 = vpow.pop %v1439
        %v1441 = vmul.f32 %v1219, 1.442695
        %v1442 = vpow.pop %v1441
        %v1443 = vmul.f32 %v1220, 1.442695
        %v1444 = vpow.pop %v1443
        %v1445 = vmul.f32 %v1221, 1.442695
        %v1446 = vpow.pop %v1445
        %v1447 = vmul.f32 %v1222, 1.442695
        %v1448 = vpow.pop %v1447
        %v1449 = vmul.f32 %v1223, 1.442695
        %v1450 = vpow.pop %v1449
        %v1451 = vmul.f32 %v1224, 1.442695
        %v1452 = vpow.pop %v1451
        %v1453 = vmul.f32 %v1225, 1.442695
        %v1454 = vpow.pop %v1453
        %v1455 = vmul.f32 %v1226, 1.442695
        %v1456 = vpow.pop %v1455
        %v1457 = vmul.f32 %v1227, 1.442695
        %v1458 = vpow.pop %v1457
        %v1459 = vmul.f32 %v1228, 1.442695
        %v1460 = vpow.pop %v1459
        %v1461 = vmul.f32 %v1229, 1.442695
        %v1462 = vpow.pop %v1461
        %v1463 = vmul.f32 %v1230, 1.442695
        %v1464 = vpow.pop %v1463
        %v1465 = vmul.f32 %v1231, 1.442695
        %v1466 = vpow.pop %v1465
        %v1467 = vmul.f32 %v1232, 1.442695
        %v1468 = vpow.pop %v1467
        %v1469 = vmul.f32 %v1233, 1.442695
        %v1470 = vpow.pop %v1469
        %v1471 = vmul.f32 %v1234, 1.442695
        %v1472 = vpow.pop %v1471
        %v1473 = vmul.f32 %v1235, 1.442695
        %v1474 = vpow.pop %v1473
        %v1475 = vmul.f32 %v1236, 1.442695
        %v1476 = vpow.pop %v1475
        %v1477 = vmul.f32 %v1237, 1.442695
        %v1478 = vpow.pop %v1477
        %v1479 = vmul.f32 %v1238, 1.442695
        %v1480 = vpow.pop %v1479
        %v1481 = vmul.f32 %v1239, 1.442695
        %v1482 = vpow.pop %v1481
        %v1483 = vmul.f32 %v1240, 1.442695
        %v1484 = vpow.pop %v1483
        %v1485 = vmul.f32 %v1241, 1.442695
        %v1486 = vpow.pop %v1485
        %v1487 = vmul.f32 %v1242, 1.442695
        %v1488 = vpow.pop %v1487
        %v1489 = vmul.f32 %v1243, 1.442695
        %v1490 = vpow.pop %v1489
        %v1491 = vmul.f32 %v1244, 1.442695
        %v1492 = vpow.pop %v1491
        %v1493 = vmul.f32 %v1245, 1.442695
        %v1494 = vpow.pop %v1493
        %v1495 = vmul.f32 %v1246, 1.442695
        %v1496 = vpow.pop %v1495
        %v1497 = vmul.f32 %v1247, 1.442695
        %v1498 = vpow.pop %v1497
        %v1499 = vmul.f32 %v1248, 1.442695
        %v1500 = vpow.pop %v1499
        %v1501 = vmul.f32 %v1249, 1.442695
        %v1502 = vpow.pop %v1501
        %v1503 = vmul.f32 %v1250, 1.442695
        %v1504 = vpow.pop %v1503
        %v1505 = vmul.f32 %v1251, 1.442695
        %v1506 = vpow.pop %v1505
        %v1507 = vmul.f32 %v1252, 1.442695
        %v1508 = vpow.pop %v1507
        %v1509 = vadd.f32 %v1254, %v1258
        %v1510 = vadd.f32 %v1509, %v1262
        %v1511 = vadd.f32 %v1510, %v1266
        %v1512 = vadd.f32 %v1511, %v1270
        %v1513 = vadd.f32 %v1512, %v1274
        %v1514 = vadd.f32 %v1513, %v1278
        %v1515 = vadd.f32 %v1514, %v1282
        %v1516 = vadd.f32 %v1515, %v1286
        %v1517 = vadd.f32 %v1516, %v1290
        %v1518 = vadd.f32 %v1517, %v1294
        %v1519 = vadd.f32 %v1518, %v1298
        %v1520 = vadd.f32 %v1519, %v1302
        %v1521 = vadd.f32 %v1520, %v1306
        %v1522 = vadd.f32 %v1521, %v1310
        %v1523 = vadd.f32 %v1522, %v1314
        %v1524 = vadd.f32 %v1523, %v1318
        %v1525 = vadd.f32 %v1524, %v1322
        %v1526 = vadd.f32 %v1525, %v1326
        %v1527 = vadd.f32 %v1526, %v1330
        %v1528 = vadd.f32 %v1527, %v1334
        %v1529 = vadd.f32 %v1528, %v1338
        %v1530 = vadd.f32 %v1529, %v1342
        %v1531 = vadd.f32 %v1530, %v1346
        %v1532 = vadd.f32 %v1531, %v1350
        %v1533 = vadd.f32 %v1532, %v1354
        %v1534 = vadd.f32 %v1533, %v1358
        %v1535 = vadd.f32 %v1534, %v1362
        %v1536 = vadd.f32 %v1535, %v1366
        %v1537 = vadd.f32 %v1536, %v1370
        %v1538 = vadd.f32 %v1537, %v1374
        %v1539 = vadd.f32 %v1538, %v1378
        %v1540 = vadd.f32 %v1539, %v1382
        %v1541 = vadd.f32 %v1540, %v1386
        %v1542 = vadd.f32 %v1541, %v1390
        %v1543 = vadd.f32 %v1542, %v1394
        %v1544 = vadd.f32 %v1543, %v1398
        %v1545 = vadd.f32 %v1544, %v1402
        %v1546 = vadd.f32 %v1545, %v1406
        %v1547 = vadd.f32 %v1546, %v1410
        %v1548 = vadd.f32 %v1547, %v1414
        %v1549 = vadd.f32 %v1548, %v1418
        %v1550 = vadd.f32 %v1549, %v1422
        %v1551 = vadd.f32 %v1550, %v1426
        %v1552 = vadd.f32 %v1551, %v1430
        %v1553 = vadd.f32 %v1552, %v1434
        %v1554 = vadd.f32 %v1553, %v1438
        %v1555 = vadd.f32 %v1554, %v1442
        %v1556 = vadd.f32 %v1555, %v1446
        %v1557 = vadd.f32 %v1556, %v1450
        %v1558 = vadd.f32 %v1557, %v1454
        %v1559 = vadd.f32 %v1558, %v1458
        %v1560 = vadd.f32 %v1559, %v1462
        %v1561 = vadd.f32 %v1560, %v1466
        %v1562 = vadd.f32 %v1561, %v1470
        %v1563 = vadd.f32 %v1562, %v1474
        %v1564 = vadd.f32 %v1563, %v1478
        %v1565 = vadd.f32 %v1564, %v1482
        %v1566 = vadd.f32 %v1565, %v1486
        %v1567 = vadd.f32 %v1566, %v1490
        %v1568 = vadd.f32 %v1567, %v1494
        %v1569 = vadd.f32 %v1568, %v1498
        %v1570 = vadd.f32 %v1569, %v1502
        %v1571 = vadd.f32 %v1570, %v1506
        %v1572 = vrot.slane %v1571, 4
        %v1573 = vadd.f32 %v1571, %v1572
        %v1574 = vrot.slane %v1573, 2
        %v1575 = vadd.f32 %v1573, %v1574
        %v1576 = vrot.slane %v1575, 1
        %v1577 = vadd.f32 %v1575, %v1576
        %v1578 = vadd.f32 %v1256, %v1260
        %v1579 = vadd.f32 %v1578, %v1264
        %v1580 = vadd.f32 %v1579, %v1268
        %v1581 = vadd.f32 %v1580, %v1272
        %v1582 = vadd.f32 %v1581, %v1276
        %v1583 = vadd.f32 %v1582, %v1280
        %v1584 = vadd.f32 %v1583, %v1284
        %v1585 = vadd.f32 %v1584, %v1288
        %v1586 = vadd.f32 %v1585, %v1292
        %v1587 = vadd.f32 %v1586, %v1296
        %v1588 = vadd.f32 %v1587, %v1300
        %v1589 = vadd.f32 %v1588, %v1304
        %v1590 = vadd.f32 %v1589, %v1308
        %v1591 = vadd.f32 %v1590, %v1312
        %v1592 = vadd.f32 %v1591, %v1316
        %v1593 = vadd.f32 %v1592, %v1320
        %v1594 = vadd.f32 %v1593, %v1324
        %v1595 = vadd.f32 %v1594, %v1328
        %v1596 = vadd.f32 %v1595, %v1332
        %v1597 = vadd.f32 %v1596, %v1336
        %v1598 = vadd.f32 %v1597, %v1340
        %v1599 = vadd.f32 %v1598, %v1344
        %v1600 = vadd.f32 %v1599, %v1348
        %v1601 = vadd.f32 %v1600, %v1352
        %v1602 = vadd.f32 %v1601, %v1356
        %v1603 = vadd.f32 %v1602, %v1360
        %v1604 = vadd.f32 %v1603, %v1364
        %v1605 = vadd.f32 %v1604, %v1368
        %v1606 = vadd.f32 %v1605, %v1372
        %v1607 = vadd.f32 %v1606, %v1376
        %v1608 = vadd.f32 %v1607, %v1380
        %v1609 = vadd.f32 %v1608, %v1384
        %v1610 = vadd.f32 %v1609, %v1388
        %v1611 = vadd.f32 %v1610, %v1392
        %v1612 = vadd.f32 %v1611, %v1396
        %v1613 = vadd.f32 %v1612, %v1400
        %v1614 = vadd.f32 %v1613, %v1404
        %v1615 = vadd.f32 %v1614, %v1408
        %v1616 = vadd.f32 %v1615, %v1412
        %v1617 = vadd.f32 %v1616, %v1416
        %v1618 = vadd.f32 %v1617, %v1420
        %v1619 = vadd.f32 %v1618, %v1424
        %v1620 = vadd.f32 %v1619, %v1428
        %v1621 = vadd.f32 %v1620, %v1432
        %v1622 = vadd.f32 %v1621, %v1436
        %v1623 = vadd.f32 %v1622, %v1440
        %v1624 = vadd.f32 %v1623, %v1444
        %v1625 = vadd.f32 %v1624, %v1448
        %v1626 = vadd.f32 %v1625, %v1452
        %v1627 = vadd.f32 %v1626, %v1456
        %v1628 = vadd.f32 %v1627, %v1460
        %v1629 = vadd.f32 %v1628, %v1464
        %v1630 = vadd.f32 %v1629, %v1468
        %v1631 = vadd.f32 %v1630, %v1472
        %v1632 = vadd.f32 %v1631, %v1476
        %v1633 = vadd.f32 %v1632, %v1480
        %v1634 = vadd.f32 %v1633, %v1484
        %v1635 = vadd.f32 %v1634, %v1488
        %v1636 = vadd.f32 %v1635, %v1492
        %v1637 = vadd.f32 %v1636, %v1496
        %v1638 = vadd.f32 %v1637, %v1500
        %v1639 = vadd.f32 %v1638, %v1504
        %v1640 = vadd.f32 %v1639, %v1508
        %v1641 = vrot.slane %v1640, 4
        %v1642 = vadd.f32 %v1640, %v1641
        %v1643 = vrot.slane %v1642, 2
        %v1644 = vadd.f32 %v1642, %v1643
        %v1645 = vrot.slane %v1644, 1
        %v1646 = vadd.f32 %v1644, %v1645
        %v1647 = vld [vmem:[#allocation5] sm:$0xff]
        %v1648 = vpack.c.bf16 %v1258, %v1254
        %v1649 = vpack.c.bf16 %v1260, %v1256
        %v1650 = vpack.c.bf16 %v1266, %v1262
        %v1651 = vpack.c.bf16 %v1268, %v1264
        %v1652 = vpack.c.bf16 %v1274, %v1270
        %v1653 = vpack.c.bf16 %v1276, %v1272
        %v1654 = vpack.c.bf16 %v1282, %v1278
        %v1655 = vpack.c.bf16 %v1284, %v1280
        %v1656 = vpack.c.bf16 %v1290, %v1286
        %v1657 = vpack.c.bf16 %v1292, %v1288
        %v1658 = vpack.c.bf16 %v1298, %v1294
        %v1659 = vpack.c.bf16 %v1300, %v1296
        %v1660 = vpack.c.bf16 %v1306, %v1302
        %v1661 = vpack.c.bf16 %v1308, %v1304
        %v1662 = vpack.c.bf16 %v1314, %v1310
        %v1663 = vpack.c.bf16 %v1316, %v1312
        %v1664 = vpack.c.bf16 %v1322, %v1318
        %v1665 = vpack.c.bf16 %v1324, %v1320
        %v1666 = vpack.c.bf16 %v1330, %v1326
        %v1667 = vpack.c.bf16 %v1332, %v1328
        %v1668 = vpack.c.bf16 %v1338, %v1334
        %v1669 = vpack.c.bf16 %v1340, %v1336
        %v1670 = vpack.c.bf16 %v1346, %v1342
        %v1671 = vpack.c.bf16 %v1348, %v1344
        %v1672 = vpack.c.bf16 %v1354, %v1350
        %v1673 = vpack.c.bf16 %v1356, %v1352
        %v1674 = vpack.c.bf16 %v1362, %v1358
        %v1675 = vpack.c.bf16 %v1364, %v1360
        %v1676 = vpack.c.bf16 %v1370, %v1366
        %v1677 = vpack.c.bf16 %v1372, %v1368
        %v1678 = vpack.c.bf16 %v1378, %v1374
        %v1679 = vpack.c.bf16 %v1380, %v1376
        %v1680 = vpack.c.bf16 %v1386, %v1382
        %v1681 = vpack.c.bf16 %v1388, %v1384
        %v1682 = vpack.c.bf16 %v1394, %v1390
        %v1683 = vpack.c.bf16 %v1396, %v1392
        %v1684 = vpack.c.bf16 %v1402, %v1398
        %v1685 = vpack.c.bf16 %v1404, %v1400
        %v1686 = vpack.c.bf16 %v1410, %v1406
        %v1687 = vpack.c.bf16 %v1412, %v1408
        %v1688 = vpack.c.bf16 %v1418, %v1414
        %v1689 = vpack.c.bf16 %v1420, %v1416
        %v1690 = vpack.c.bf16 %v1426, %v1422
        %v1691 = vpack.c.bf16 %v1428, %v1424
        %v1692 = vpack.c.bf16 %v1434, %v1430
        %v1693 = vpack.c.bf16 %v1436, %v1432
        %v1694 = vpack.c.bf16 %v1442, %v1438
        %v1695 = vpack.c.bf16 %v1444, %v1440
        %v1696 = vpack.c.bf16 %v1450, %v1446
        %v1697 = vpack.c.bf16 %v1452, %v1448
        %v1698 = vpack.c.bf16 %v1458, %v1454
        %v1699 = vpack.c.bf16 %v1460, %v1456
        %v1700 = vpack.c.bf16 %v1466, %v1462
        %v1701 = vpack.c.bf16 %v1468, %v1464
        %v1702 = vpack.c.bf16 %v1474, %v1470
        %v1703 = vpack.c.bf16 %v1476, %v1472
        %v1704 = vpack.c.bf16 %v1482, %v1478
        %v1705 = vpack.c.bf16 %v1484, %v1480
        %v1706 = vpack.c.bf16 %v1490, %v1486
        %v1707 = vpack.c.bf16 %v1492, %v1488
        %v1708 = vpack.c.bf16 %v1498, %v1494
        %v1709 = vpack.c.bf16 %v1500, %v1496
        %v1710 = vpack.c.bf16 %v1506, %v1502
        %v1711 = vpack.c.bf16 %v1508, %v1504
        %v1713 = vcombine.high %v1647, %v1647
        %v1715 = vunpack.c.l.s4 1983009808
        %v1716 = vunpack.c.0.s8 %v1715
        %v1717 = vlaneseq
        %v1718 = vshrl.u32 %v1717, 7
        %v1719 = vsub.s32 %v1716, %v1718
        %v1720 = vrot.slane %v1647, %v1719
        %v1722 = vunpack.c.l.s4 1983009808
        %v1723 = vunpack.c.0.s8 %v1722
        %v1724 = vlaneseq
        %v1725 = vshrl.u32 %v1724, 7
        %v1726 = vsub.s32 %v1723, %v1725
        %v1727 = vrot.slane %v1713, %v1726
        %v1728 = vcombine.high %v1720, %v1720
        %v1729 = vcombine.high %v1727, %v1727
        %1734 = vmatprep.subr.bf16.mxu0 %v1663
        %1735 = vmatpush1.bf16.msra.mxu0 %v1662
        %1736 = vmatprep.subr.bf16.mxu0 %v1661
        %1737 = vmatpush1.bf16.msra.mxu0 %v1660
        %1738 = vmatprep.subr.bf16.mxu0 %v1659
        %1739 = vmatpush1.bf16.msra.mxu0 %v1658
        %1740 = vmatprep.subr.bf16.mxu0 %v1657
        %1741 = vmatpush1.bf16.msra.mxu0 %v1656
        %1742 = vmatprep.subr.bf16.mxu0 %v1655
        %1743 = vmatpush1.bf16.msra.mxu0 %v1654
        %1744 = vmatprep.subr.bf16.mxu0 %v1653
        %1745 = vmatpush1.bf16.msra.mxu0 %v1652
        %1746 = vmatprep.subr.bf16.mxu0 %v1651
        %1747 = vmatpush1.bf16.msra.mxu0 %v1650
        %1748 = vmatprep.subr.bf16.mxu0 %v1649
        %1749 = vmatpush1.bf16.msra.mxu0 %v1648
        %1750 = vmatprep.subr.bf16.mxu0 %v1679
        %1751 = vmatpush2.bf16.msra.mxu0 %v1678
        %1752 = vmatprep.subr.bf16.mxu0 %v1677
        %1753 = vmatpush2.bf16.msra.mxu0 %v1676
        %1754 = vmatprep.subr.bf16.mxu0 %v1675
        %1755 = vmatpush2.bf16.msra.mxu0 %v1674
        %1756 = vmatprep.subr.bf16.mxu0 %v1673
        %1757 = vmatpush2.bf16.msra.mxu0 %v1672
        %1758 = vmatprep.subr.bf16.mxu0 %v1671
        %1759 = vmatpush2.bf16.msra.mxu0 %v1670
        %1760 = vmatprep.subr.bf16.mxu0 %v1669
        %1761 = vmatpush2.bf16.msra.mxu0 %v1668
        %1762 = vmatprep.subr.bf16.mxu0 %v1667
        %1763 = vmatpush2.bf16.msra.mxu0 %v1666
        %1764 = vmatprep.subr.bf16.mxu0 %v1665
        %1765 = vmatpush2.bf16.msra.mxu0 %v1664
        %1766 = vmatprep.mubr.bf16.mxu0 %v1728
        %1767 = vmatmul.mubr.bf16.gmra.mxu0 %v1720
        %v1768 = vpop.f32.mrf.mxu0
        %v1769 = vadd.f32 0.0, %v1768
        %v1770 = vpop.f32.mrf.mxu0
        %v1771 = vadd.f32 0.0, %v1770
        %v1772 = vpop.f32.mrf.mxu0
        %v1773 = vpop.f32.mrf.mxu0
        %1774 = vdwg.mxu0
        %1775 = vmatprep.subr.bf16.mxu0 %v1695
        %1776 = vmatpush1.bf16.msra.mxu0 %v1694
        %1777 = vmatprep.subr.bf16.mxu0 %v1693
        %1778 = vmatpush1.bf16.msra.mxu0 %v1692
        %1779 = vmatprep.subr.bf16.mxu0 %v1691
        %1780 = vmatpush1.bf16.msra.mxu0 %v1690
        %1781 = vmatprep.subr.bf16.mxu0 %v1689
        %1782 = vmatpush1.bf16.msra.mxu0 %v1688
        %1783 = vmatprep.subr.bf16.mxu0 %v1687
        %1784 = vmatpush1.bf16.msra.mxu0 %v1686
        %1785 = vmatprep.subr.bf16.mxu0 %v1685
        %1786 = vmatpush1.bf16.msra.mxu0 %v1684
        %1787 = vmatprep.subr.bf16.mxu0 %v1683
        %1788 = vmatpush1.bf16.msra.mxu0 %v1682
        %1789 = vmatprep.subr.bf16.mxu0 %v1681
        %1790 = vmatpush1.bf16.msra.mxu0 %v1680
        %1791 = vmatprep.subr.bf16.mxu0 %v1711
        %1792 = vmatpush2.bf16.msra.mxu0 %v1710
        %1793 = vmatprep.subr.bf16.mxu0 %v1709
        %1794 = vmatpush2.bf16.msra.mxu0 %v1708
        %1795 = vmatprep.subr.bf16.mxu0 %v1707
        %1796 = vmatpush2.bf16.msra.mxu0 %v1706
        %1797 = vmatprep.subr.bf16.mxu0 %v1705
        %1798 = vmatpush2.bf16.msra.mxu0 %v1704
        %1799 = vmatprep.subr.bf16.mxu0 %v1703
        %1800 = vmatpush2.bf16.msra.mxu0 %v1702
        %1801 = vmatprep.subr.bf16.mxu0 %v1701
        %1802 = vmatpush2.bf16.msra.mxu0 %v1700
        %1803 = vmatprep.subr.bf16.mxu0 %v1699
        %1804 = vmatpush2.bf16.msra.mxu0 %v1698
        %1805 = vmatprep.subr.bf16.mxu0 %v1697
        %1806 = vmatpush2.bf16.msra.mxu0 %v1696
        %1807 = vmatprep.mubr.bf16.mxu0 %v1729
        %1808 = vmatmul.mubr.bf16.gmra.mxu0 %v1727
        %v1809 = vpop.f32.mrf.mxu0
        %v1810 = vadd.f32 %v1769, %v1809
        %v1811 = vpop.f32.mrf.mxu0
        %v1812 = vadd.f32 %v1771, %v1811
        %v1813 = vpop.f32.mrf.mxu0
        %v1814 = vpop.f32.mrf.mxu0
        %1815 = vdwg.mxu0
        %v1816 = vrcp.pop %v1577
        %v1817 = vrcp.pop %v1646
        %v1818 = vmul.f32 %v1810, %v1816
        %v1819 = vmul.f32 %v1812, %v1817
        %v1820 = vadd.f32 %v1818, %v253
        %v1821 = vadd.f32 %v1819, %v258
        %v1822 = vsel %vm260, %v1820, 0.0
        %v1823 = vrot.slane %v1822, 4
        %v1824 = vadd.f32 %v1822, %v1823
        %v1825 = vrot.slane %v1824, 2
        %v1826 = vadd.f32 %v1824, %v1825
        %v1827 = vrot.slane %v1826, 1
        %v1828 = vadd.f32 %v1826, %v1827
        %v1829 = vsel %vm260, %v1821, 0.0
        %v1830 = vrot.slane %v1829, 4
        %v1831 = vadd.f32 %v1829, %v1830
        %v1832 = vrot.slane %v1831, 2
        %v1833 = vadd.f32 %v1831, %v1832
        %v1834 = vrot.slane %v1833, 1
        %v1835 = vadd.f32 %v1833, %v1834
        %v1836 = vmul.f32 %v1828, %v275
        %v1837 = vmul.f32 %v1835, %v275
        %v1838 = vsub.f32 %v1820, %v1836
        %v1839 = vsub.f32 %v1821, %v1837
        %v1840 = vmul.f32 %v1838, %v1838
        %v1841 = vmul.f32 %v1839, %v1839
        %v1842 = vsel %vm260, %v1840, 0.0
        %v1843 = vrot.slane %v1842, 4
        %v1844 = vadd.f32 %v1842, %v1843
        %v1845 = vrot.slane %v1844, 2
        %v1846 = vadd.f32 %v1844, %v1845
        %v1847 = vrot.slane %v1846, 1
        %v1848 = vadd.f32 %v1846, %v1847
        %v1849 = vsel %vm260, %v1841, 0.0
        %v1850 = vrot.slane %v1849, 4
        %v1851 = vadd.f32 %v1849, %v1850
        %v1852 = vrot.slane %v1851, 2
        %v1853 = vadd.f32 %v1851, %v1852
        %v1854 = vrot.slane %v1853, 1
        %v1855 = vadd.f32 %v1853, %v1854
        %v1856 = vmul.f32 %v1848, %v275
        %v1857 = vmul.f32 %v1855, %v275
        %v1858 = vadd.f32 %v1856, 1e-05
        %v1859 = vadd.f32 %v1857, 1e-05
        %v1860 = vrsqrt.pop %v1858
        %v1861 = vrsqrt.pop %v1859
        %v1862 = vmul.f32 %v1838, %v1860
        %v1863 = vmul.f32 %v1839, %v1861
        %1864 = vset.pattern.permute.xlu0 2
        %1865 = vperm.xlu0 %1864, %v256
        %v1866 = vpop.permute.xlu0 %1865
        %v1868 = vmul.f32 %v1862, %v1866
        %v1869 = vmul.f32 %v1863, %v1866
        %1870 = vset.pattern.permute.xlu0 3
        %1871 = vperm.xlu0 %1870, %v256
        %v1872 = vpop.permute.xlu0 %1871
        %v1874 = vadd.f32 %v1868, %v1872
        %v1875 = vadd.f32 %v1869, %v1872
        %v1876 = vlaneseq
        %v1877 = vshrl.u32 %v1876, 7
        %v1878 = vsub.s32 0, %v1877
        %v1879 = vrot.slane %v1874, %v1878
        %v1880 = vlaneseq
        %v1881 = vshrl.u32 %v1880, 7
        %v1882 = vsub.s32 0, %v1881
        %v1883 = vrot.slane %v1875, %v1882
        %v1884 = vmul.f32 %v340, %v1879
        %v1885 = vmul.f32 %v340, %v1883
        %v1886 = vlaneseq
        %v1887 = vshrl.u32 %v1886, 7
        %v1888 = vsub.s32 1, %v1887
        %v1889 = vrot.slane %v1874, %v1888
        %v1890 = vlaneseq
        %v1891 = vshrl.u32 %v1890, 7
        %v1892 = vsub.s32 1, %v1891
        %v1893 = vrot.slane %v1875, %v1892
        %v1894 = vmul.f32 %v365, %v1889
        %v1895 = vmul.f32 %v365, %v1893
        %v1896 = vadd.f32 %v1884, %v1894
        %v1897 = vadd.f32 %v1885, %v1895
        %v1898 = vlaneseq
        %v1899 = vshrl.u32 %v1898, 7
        %v1900 = vsub.s32 2, %v1899
        %v1901 = vrot.slane %v1874, %v1900
        %v1902 = vlaneseq
        %v1903 = vshrl.u32 %v1902, 7
        %v1904 = vsub.s32 2, %v1903
        %v1905 = vrot.slane %v1875, %v1904
        %v1906 = vmul.f32 %v391, %v1901
        %v1907 = vmul.f32 %v391, %v1905
        %v1908 = vadd.f32 %v1896, %v1906
        %v1909 = vadd.f32 %v1897, %v1907
        %v1910 = vlaneseq
        %v1911 = vshrl.u32 %v1910, 7
        %v1912 = vsub.s32 3, %v1911
        %v1913 = vrot.slane %v1874, %v1912
        %v1914 = vlaneseq
        %v1915 = vshrl.u32 %v1914, 7
        %v1916 = vsub.s32 3, %v1915
        %v1917 = vrot.slane %v1875, %v1916
        %v1918 = vmul.f32 %v417, %v1913
        %v1919 = vmul.f32 %v417, %v1917
        %v1920 = vadd.f32 %v1908, %v1918
        %v1921 = vadd.f32 %v1909, %v1919
        %v1924 = vrot.slane %v1920, 4
        %v1925 = vrot.slane %v1921, 4
        %v1928 = vsel %vm260, %v1924, 0.0
        %v1929 = vrot.slane %v1928, 4
        %v1930 = vadd.f32 %v1928, %v1929
        %v1931 = vrot.slane %v1930, 2
        %v1932 = vadd.f32 %v1930, %v1931
        %v1933 = vrot.slane %v1932, 1
        %v1934 = vadd.f32 %v1932, %v1933
        %v1935 = vsel %vm260, %v1925, 0.0
        %v1936 = vrot.slane %v1935, 4
        %v1937 = vadd.f32 %v1935, %v1936
        %v1938 = vrot.slane %v1937, 2
        %v1939 = vadd.f32 %v1937, %v1938
        %v1940 = vrot.slane %v1939, 1
        %v1941 = vadd.f32 %v1939, %v1940
        %v1942 = vmul.f32 %v1934, %v275
        %v1943 = vmul.f32 %v1941, %v275
        %v1944 = vsub.f32 %v1920, %v1942
        %v1945 = vsub.f32 %v1921, %v1943
        %v1946 = vmul.f32 %v1944, %v1944
        %v1947 = vmul.f32 %v1945, %v1945
        %v1950 = vrot.slane %v1946, 4
        %v1951 = vrot.slane %v1947, 4
        %v1954 = vsel %vm260, %v1950, 0.0
        %v1955 = vrot.slane %v1954, 4
        %v1956 = vadd.f32 %v1954, %v1955
        %v1957 = vrot.slane %v1956, 2
        %v1958 = vadd.f32 %v1956, %v1957
        %v1959 = vrot.slane %v1958, 1
        %v1960 = vadd.f32 %v1958, %v1959
        %v1961 = vsel %vm260, %v1951, 0.0
        %v1962 = vrot.slane %v1961, 4
        %v1963 = vadd.f32 %v1961, %v1962
        %v1964 = vrot.slane %v1963, 2
        %v1965 = vadd.f32 %v1963, %v1964
        %v1966 = vrot.slane %v1965, 1
        %v1967 = vadd.f32 %v1965, %v1966
        %v1968 = vmul.f32 %v1960, %v275
        %v1969 = vmul.f32 %v1967, %v275
        %v1970 = vadd.f32 %v1968, 1e-05
        %v1971 = vadd.f32 %v1969, 1e-05
        %v1972 = vrsqrt.pop %v1970
        %v1973 = vrsqrt.pop %v1971
        %v1974 = vmul.f32 %v1944, %v1972
        %v1975 = vmul.f32 %v1945, %v1973
        %1976 = vset.pattern.permute.xlu0 4
        %1977 = vperm.xlu0 %1976, %v256
        %v1978 = vpop.permute.xlu0 %1977
        %v1979 = vrot.slane %v1978, 4
        %v1981 = vmul.f32 %v1974, %v1979
        %v1982 = vmul.f32 %v1975, %v1979
        %1983 = vset.pattern.permute.xlu0 5
        %1984 = vperm.xlu0 %1983, %v256
        %v1985 = vpop.permute.xlu0 %1984
        %v1986 = vrot.slane %v1985, 4
        %v1988 = vadd.f32 %v1981, %v1986
        %v1989 = vadd.f32 %v1982, %v1986
        %1991 = vset.pattern.permute.xlu0 0
        %1992 = vperm.xlu0 %1991, %v255
        %v1993 = vpop.permute.xlu0 %1992
        %v1995 = vlaneseq
        %v1996 = vshrl.u32 %v1995, 7
        %v1997 = vsub.s32 4, %v1996
        %v1998 = vrot.slane %v1988, %v1997
        %v1999 = vlaneseq
        %v2000 = vshrl.u32 %v1999, 7
        %v2001 = vsub.s32 4, %v2000
        %v2002 = vrot.slane %v1989, %v2001
        %v2003 = vmul.f32 %v1993, %v1998
        %v2004 = vmul.f32 %v1993, %v2002
        %2005 = vset.pattern.permute.xlu0 1
        %2006 = vperm.xlu0 %2005, %v255
        %v2007 = vpop.permute.xlu0 %2006
        %v2009 = vlaneseq
        %v2010 = vshrl.u32 %v2009, 7
        %v2011 = vsub.s32 5, %v2010
        %v2012 = vrot.slane %v1988, %v2011
        %v2013 = vlaneseq
        %v2014 = vshrl.u32 %v2013, 7
        %v2015 = vsub.s32 5, %v2014
        %v2016 = vrot.slane %v1989, %v2015
        %v2017 = vmul.f32 %v2007, %v2012
        %v2018 = vmul.f32 %v2007, %v2016
        %v2019 = vadd.f32 %v2003, %v2017
        %v2020 = vadd.f32 %v2004, %v2018
        %2021 = vset.pattern.permute.xlu0 2
        %2022 = vperm.xlu0 %2021, %v255
        %v2023 = vpop.permute.xlu0 %2022
        %v2025 = vlaneseq
        %v2026 = vshrl.u32 %v2025, 7
        %v2027 = vsub.s32 6, %v2026
        %v2028 = vrot.slane %v1988, %v2027
        %v2029 = vlaneseq
        %v2030 = vshrl.u32 %v2029, 7
        %v2031 = vsub.s32 6, %v2030
        %v2032 = vrot.slane %v1989, %v2031
        %v2033 = vmul.f32 %v2023, %v2028
        %v2034 = vmul.f32 %v2023, %v2032
        %v2035 = vadd.f32 %v2019, %v2033
        %v2036 = vadd.f32 %v2020, %v2034
        %2037 = vset.pattern.permute.xlu0 3
        %2038 = vperm.xlu0 %2037, %v255
        %v2039 = vpop.permute.xlu0 %2038
        %v2041 = vlaneseq
        %v2042 = vshrl.u32 %v2041, 7
        %v2043 = vsub.s32 7, %v2042
        %v2044 = vrot.slane %v1988, %v2043
        %v2045 = vlaneseq
        %v2046 = vshrl.u32 %v2045, 7
        %v2047 = vsub.s32 7, %v2046
        %v2048 = vrot.slane %v1989, %v2047
        %v2049 = vmul.f32 %v2039, %v2044
        %v2050 = vmul.f32 %v2039, %v2048
        %v2051 = vadd.f32 %v2035, %v2049
        %v2052 = vadd.f32 %v2036, %v2050
        %v2053 = vadd.f32 %v2051, %v1820
        %v2054 = vadd.f32 %v2052, %v1821
        %v2057 = vcombine.low %v2053, %v2054
        %2059 = vst [vmem:[%s244] sm:$0xff] %v2057
        %s2060 = sand.u32 %s139, 1
        %s2061 = scalar_lea.sflag [#allocation4], %s2060
        %s2062 = sand.u32 %s139, 1
        %s2063 = smul.addr %s2062, 8
        %s2064 = scalar_lea.vmem [#allocation7], %s2063
        // Predicated region
        $region49: #{tpu_custom_call.1} parent=39 // pred_check
          %p2065 = pneg %p149
        $region50: #{tpu_custom_call.1} parent=39 // pred_check_branch
          %2067 = sbr.rel (%p2065) target = $region52
        $region51: #{tpu_custom_call.1} parent=39 // pred_region
          %s2068 = smul.u32 2, %s21
          %s2070 = ssub.s32 128, 128
          %2071 = vsyncadd %s2061, %s2070
          %s2072 = smul.addr %s2068, 64
          %s2073 = scalar_lea.hbm %s5, %s2072
          %s2075 = sshll.u32 %s2064, 4
          %s2076 = int_to_ptr.vmem [resolvable:$true] %s2075
          %2078 = dma.vmem_to_hbm [thread:$0]  %s2076, 128, %s2073, %s2061
        $region52: #{tpu_custom_call.1} parent=39 // pred_fallthru
          _
      $region40: #{tpu_custom_call.1} parent=5 // pred_fallthru
        _
      %p2079 = scmp.le.s32.totalorder 2, %s16
      // Predicated region
      $region53: #{tpu_custom_call.1} parent=5 // pred_check
        %p2080 = pneg %p2079
      $region54: #{tpu_custom_call.1} parent=5 // pred_check_branch
        %2082 = sbr.rel (%p2080) target = $region56
      $region55: #{tpu_custom_call.1} parent=5 // pred_region
        %s2083 = ssub.s32 %s16, 2
        // Predicated region
        $region57: #{tpu_custom_call.1} parent=55 // pred_check
          %p2084 = pneg %p155
        $region58: #{tpu_custom_call.1} parent=55 // pred_check_branch
          %2086 = sbr.rel (%p2084) target = $region60
        $region59: #{tpu_custom_call.1} parent=55 // pred_region
          %s2087 = sand.u32 %s140, 1
          %s2088 = scalar_lea.sflag [#allocation4], %s2087
          %s2089 = sand.u32 %s140, 1
          %s2090 = smul.addr %s2089, 8
          %s2091 = scalar_lea.vmem [#allocation7], %s2090
          %2092 = dma.done %s2088, 128
        $region60: #{tpu_custom_call.1} parent=55 // pred_fallthru
          _
      $region56: #{tpu_custom_call.1} parent=5 // pred_fallthru
        _
    $region6: #{tpu_custom_call.1} parent=1 // loop_footer
      %s20 = sadd.s32 1, %s16
    $region7: #{tpu_custom_call.1} parent=1 // loop_footer_branch
      %15 = sbr.rel target = $region3
    $region8: #{tpu_custom_call.1} parent=1 // loop_exit
      _
    %2093 = vsyncpa [#allocation3], 1
    %s2094 = scalar_lea.sflag [#allocation3], 1
    %2095 = vsyncpa %s2094, 1
    %2096 = vsyncpa [#allocation6], 1
    %2097 = vsyncpa [#allocation4], 1
    %s2098 = scalar_lea.sflag [#allocation4], 1
    %2099 = vsyncpa %s2098, 1

</llo_original>
